<compile_context>
chip_gen: v5e
topology: v5e:2x2
jax: 0.10.0
libtpu: 0.0.40
codegen_flags: <defaults>
</compile_context>

<pallas_src>
import jax
import jax.numpy as jnp
from jax import lax
from jax.experimental import pallas as pl
from jax.experimental.pallas import tpu as pltpu


def _mp_cov_kernel(params_ref, noise_sum_ref, xr_ref, xc_ref, gsq_r_ref, gsq_c_ref,
                   cov_ref):
    """Grid = (i: row tiles, j: col tiles, g: GPs). g is the reduction axis (last,
    'arbitrary'): the (T, T) cov tile accumulates in VMEM across g."""
    i = pl.program_id(0)
    j = pl.program_id(1)
    g = pl.program_id(2)
    n_g = pl.num_programs(2)

    @pl.when(g == 0)
    def _init():
        cov_ref[...] = jnp.zeros_like(cov_ref)

    # Per-GP scalar hyperparameters from SMEM.
    s2 = params_ref[g, 0]
    gamma = params_ref[g, 1]      # 1 / lengthscale^2

    xr = xr_ref[0].astype(jnp.float32)        # (T, D) row block of GP g's inputs
    xc = xc_ref[0].astype(jnp.float32)        # (T, D) col block of GP g's inputs

    # Gram block on the MXU, contracting the feature axis directly (no x.T materialized).
    xx = lax.dot_general(
        xr, xc,
        dimension_numbers=(((1,), (1,)), ((), ())),
        preferred_element_type=jnp.float32,
    )                                          # (T, T)

    gsq_r = gsq_r_ref[0]                       # (T, 1)  = 0.5 * gamma * ||x_row||^2
    gsq_c = gsq_c_ref[0]                       # (1, T)  = 0.5 * gamma * ||x_col||^2

    # arg = -0.5 * gamma * ||xr_a - xc_b||^2, with the d2 >= 0 clamp folded into arg <= 0.
    arg = jnp.minimum(gamma * xx - gsq_r - gsq_c, 0.0)
    cov_ref[...] += s2 * jnp.exp(arg)

    # After the last GP, add the summed white-noise term on the *global* diagonal (once).
    # tm == tn, so the diagonal only intersects i == j tiles.
    @pl.when(jnp.logical_and(g == n_g - 1, i == j))
    def _finalize():
        tm, tn = cov_ref.shape
        row = i * tm + lax.broadcasted_iota(jnp.int32, (tm, tn), 0)
        col = j * tn + lax.broadcasted_iota(jnp.int32, (tm, tn), 1)
        cov_ref[...] += jnp.where(row == col, noise_sum_ref[0], 0.0)


def _pick_tile(n, pref=256):
    """Largest tile <= pref that is a multiple of 128 and divides n; else full n."""
    if n <= pref:
        return n
    t = (pref // 128) * 128
    while t >= 128:
        if n % t == 0:
            return t
        t -= 128
    return n


def multiprocess_forward(params, Xs):
    """params: f32[G, 4] = (s2, gamma, noise, const_mean) per GP; Xs: f32[G, N, D].
    Returns (loc f32[N], cov f32[N, N]) parameterizing the summed MVN."""
    G, N, D = Xs.shape
    params = params.astype(jnp.float32)
    Xs = Xs.astype(jnp.float32)

    t = _pick_tile(N)   # single tile size for rows and cols (tm == tn)

    # Hoisted out of the hot loop (cheap one-shot XLA):
    #   loc       = (sum_g cmean_g) * ones(N)
    #   noise_sum = sum_g noise_g                      (added on the diagonal in-kernel)
    #   gsq[g, n] = 0.5 * gamma_g * ||X_g[n]||^2       (streamed as row / col blocks)
    loc = jnp.full((N,), jnp.sum(params[:, 3]), dtype=jnp.float32)
    noise_sum = jnp.sum(params[:, 2]).reshape(1)
    gsq = 0.5 * params[:, 1][:, None] * jnp.sum(Xs * Xs, axis=-1)   # (G, N)
    gsq_rows = gsq[:, :, None]                                      # (G, N, 1)
    gsq_cols = gsq[:, None, :]                                      # (G, 1, N)

    cov = pl.pallas_call(
        _mp_cov_kernel,
        out_shape=jax.ShapeDtypeStruct((N, N), jnp.float32),
        grid_spec=pltpu.PrefetchScalarGridSpec(
            num_scalar_prefetch=0,
            grid=(N // t, N // t, G),
            in_specs=[
                pl.BlockSpec(memory_space=pltpu.MemorySpace.SMEM),    # params [G, 4]
                pl.BlockSpec(memory_space=pltpu.MemorySpace.SMEM),    # noise_sum [1]
                pl.BlockSpec((1, t, D), lambda i, j, g: (g, i, 0)),   # row block of X_g
                pl.BlockSpec((1, t, D), lambda i, j, g: (g, j, 0)),   # col block of X_g
                pl.BlockSpec((1, t, 1), lambda i, j, g: (g, i, 0)),   # row half-sq-norms
                pl.BlockSpec((1, 1, t), lambda i, j, g: (g, 0, j)),   # col half-sq-norms
            ],
            out_specs=pl.BlockSpec((t, t), lambda i, j, g: (i, j)),   # resident across g
        ),
        compiler_params=pltpu.CompilerParams(
            dimension_semantics=("parallel", "parallel", "arbitrary"),
        ),
    )(params, noise_sum, Xs, Xs, gsq_rows, gsq_cols)
    return loc, cov


def _reference(params, Xs):
    G, N, D = Xs.shape
    loc = jnp.zeros((N,), jnp.float32)
    cov = jnp.zeros((N, N), jnp.float32)
    eye = jnp.eye(N, dtype=jnp.float32)
    for g in range(G):
        x = Xs[g].astype(jnp.float32)
        s2, gamma, noise, cmean = [params[g, i] for i in range(4)]
        sq = jnp.sum(x * x, axis=-1, keepdims=True)
        xx = lax.dot_general(x, x, dimension_numbers=(((1,), (1,)), ((), ())),
                             preferred_element_type=jnp.float32)
        d2 = jnp.maximum(sq + sq.T - 2.0 * xx, 0.0)
        cov = cov + s2 * jnp.exp(-0.5 * gamma * d2) + noise * eye
        loc = loc + cmean
    return loc, cov


if __name__ == "__main__":
    base_key = jax.random.PRNGKey(0)

    def run_case(G, N, D, case_id):
        key = jax.random.fold_in(base_key, case_id)
        Xs = jax.random.normal(key, (G, N, D), dtype=jnp.float32)
        # Deterministic per-GP hyperparameters: (signal variance, 1/lengthscale^2, noise, const mean)
        params = jnp.stack(
            [
                jnp.array([1.0 + 0.5 * g,
                           1.0 / (1.0 + 0.25 * g) ** 2,
                           1e-2 * (g + 1),
                           0.1 * (g + 1)], dtype=jnp.float32)
                for g in range(G)
            ]
        )
        loc, cov = multiprocess_forward(params, Xs)
        loc = jax.block_until_ready(loc)
        cov = jax.block_until_ready(cov)
        loc_ref, cov_ref = _reference(params, Xs)
        assert jnp.allclose(loc, loc_ref, atol=1e-4, rtol=1e-4), f"loc mismatch (N={N})"
        assert jnp.allclose(cov, cov_ref, atol=1e-4, rtol=1e-4), f"cov mismatch (N={N})"

    # Tiled path: 256x256 cov tiles, grid (2, 2, 2) — diagonal & off-diagonal tiles.
    run_case(G=2, N=512, D=32, case_id=0)
    # Full-block path: tiny N, block shapes equal to full array dims, grid (1, 1, 3).
    run_case(G=3, N=8, D=16, case_id=1)
    # 128-wide tile fallback (N not divisible by 256), single GP (init+finalize same step).
    run_case(G=1, N=384, D=8, case_id=2)

    print("KERNEL_OK")
</pallas_src>

<mosaic_0001>
module attributes {stable_mosaic.version = 11 : i64} {
  func.func @_mp_cov_kernel(%arg0: i32, %arg1: i32, %arg2: i32, %arg3: memref<2x4xf32, #tpu.memory_space<smem>>, %arg4: memref<1xf32, #tpu.memory_space<smem>>, %arg5: memref<1x256x32xf32, #tpu.memory_space<vmem>>, %arg6: memref<1x256x32xf32, #tpu.memory_space<vmem>>, %arg7: memref<1x256x1xf32, #tpu.memory_space<vmem>>, %arg8: memref<1x1x256xf32, #tpu.memory_space<vmem>>, %arg9: memref<256x256xf32, #tpu.memory_space<vmem>>) attributes {dimension_semantics = [#tpu.dimension_semantics<parallel>, #tpu.dimension_semantics<parallel>, #tpu.dimension_semantics<arbitrary>], iteration_bounds = array<i64: 2, 2, 2>, scalar_prefetch = 0 : i64, scratch_operands = 0 : i64, tpu.core_type = #tpu.core_type<tc>, window_params = [{transform_indices = @transform_0, window_bounds = array<i64: 2, 4>}, {transform_indices = @transform_1, window_bounds = array<i64: 1>}, {transform_indices = @transform_2, window_bounds = array<i64: 1, 256, 32>}, {transform_indices = @transform_3, window_bounds = array<i64: 1, 256, 32>}, {transform_indices = @transform_4, window_bounds = array<i64: 1, 256, 1>}, {transform_indices = @transform_5, window_bounds = array<i64: 1, 1, 256>}, {transform_indices = @transform_6, window_bounds = array<i64: 256, 256>}]} {
    %c0_i32 = arith.constant 0 : i32
    %0 = arith.cmpi eq, %arg2, %c0_i32 : i32
    %1 = arith.extui %0 : i1 to i32
    %c0_i32_0 = arith.constant 0 : i32
    %2 = arith.cmpi ne, %1, %c0_i32_0 : i32
    scf.if %2 {
      %cst_19 = arith.constant 0.000000e+00 : f32
      %35 = vector.broadcast %cst_19 : f32 to vector<256x256xf32>
      %c0_20 = arith.constant 0 : index
      %c0_21 = arith.constant 0 : index
      %36 = vector.load %arg9[%c0_20, %c0_21] : memref<256x256xf32, #tpu.memory_space<vmem>>, vector<256x256xf32>
      tpu.vector_store %arg9[%c0_20, %c0_21], %35 {strides = array<i32>} : memref<256x256xf32, #tpu.memory_space<vmem>>, vector<256x256xf32>,
    } else {
    }
    %3 = arith.index_cast %arg2 : i32 to index
    %c0 = arith.constant 0 : index
    %4 = memref.load %arg3[%3, %c0] : memref<2x4xf32, #tpu.memory_space<smem>>
    %5 = arith.index_cast %arg2 : i32 to index
    %c1 = arith.constant 1 : index
    %6 = memref.load %arg3[%5, %c1] : memref<2x4xf32, #tpu.memory_space<smem>>
    %c0_1 = arith.constant 0 : index
    %c0_2 = arith.constant 0 : index
    %c0_3 = arith.constant 0 : index
    %7 = vector.load %arg5[%c0_1, %c0_2, %c0_3] : memref<1x256x32xf32, #tpu.memory_space<vmem>>, vector<1x256x32xf32>
    %8 = vector.shape_cast %7 : vector<1x256x32xf32> to vector<256x32xf32>
    %c0_4 = arith.constant 0 : index
    %c0_5 = arith.constant 0 : index
    %c0_6 = arith.constant 0 : index
    %9 = vector.load %arg6[%c0_4, %c0_5, %c0_6] : memref<1x256x32xf32, #tpu.memory_space<vmem>>, vector<1x256x32xf32>
    %10 = vector.shape_cast %9 : vector<1x256x32xf32> to vector<256x32xf32>
    %cst = arith.constant dense<0.000000e+00> : vector<256x256xf32>
    %11 = tpu.matmul %8, %10, %cst {dimension_numbers = #tpu.dot_dimension_numbers<[1], [1], [0], [0], [0, 0, 1, 0], [], []>} : vector<256x32xf32>, vector<256x32xf32>, vector<256x256xf32> -> vector<256x256xf32>
    %c0_7 = arith.constant 0 : index
    %c0_8 = arith.constant 0 : index
    %c0_9 = arith.constant 0 : index
    %12 = vector.load %arg7[%c0_7, %c0_8, %c0_9] : memref<1x256x1xf32, #tpu.memory_space<vmem>>, vector<1x256x1xf32>
    %13 = vector.shape_cast %12 : vector<1x256x1xf32> to vector<256x1xf32>
    %c0_10 = arith.constant 0 : index
    %c0_11 = arith.constant 0 : index
    %c0_12 = arith.constant 0 : index
    %14 = vector.load %arg8[%c0_10, %c0_11, %c0_12] : memref<1x1x256xf32, #tpu.memory_space<vmem>>, vector<1x1x256xf32>
    %15 = vector.shape_cast %14 : vector<1x1x256xf32> to vector<1x256xf32>
    %16 = vector.broadcast %6 : f32 to vector<256x256xf32>
    %17 = arith.mulf %16, %11 : vector<256x256xf32>
    %18 = vector.broadcast %13 : vector<256x1xf32> to vector<256x256xf32>
    %19 = arith.subf %17, %18 : vector<256x256xf32>
    %20 = vector.broadcast %15 : vector<1x256xf32> to vector<256x256xf32>
    %21 = arith.subf %19, %20 : vector<256x256xf32>
    %cst_13 = arith.constant 0.000000e+00 : f32
    %22 = vector.broadcast %cst_13 : f32 to vector<256x256xf32>
    %23 = arith.minimumf %21, %22 : vector<256x256xf32>
    %c0_14 = arith.constant 0 : index
    %c0_15 = arith.constant 0 : index
    %24 = vector.load %arg9[%c0_14, %c0_15] : memref<256x256xf32, #tpu.memory_space<vmem>>, vector<256x256xf32>
    %25 = math.exp %23 : vector<256x256xf32>
    %26 = vector.broadcast %4 : f32 to vector<256x256xf32>
    %27 = arith.mulf %26, %25 : vector<256x256xf32>
    %28 = arith.addf %24, %27 : vector<256x256xf32>
    %c0_16 = arith.constant 0 : index
    %c0_17 = arith.constant 0 : index
    %29 = vector.load %arg9[%c0_16, %c0_17] : memref<256x256xf32, #tpu.memory_space<vmem>>, vector<256x256xf32>
    tpu.vector_store %arg9[%c0_16, %c0_17], %28 {strides = array<i32>} : memref<256x256xf32, #tpu.memory_space<vmem>>, vector<256x256xf32>,
    %c1_i32 = arith.constant 1 : i32
    %30 = arith.cmpi eq, %arg2, %c1_i32 : i32
    %31 = arith.cmpi eq, %arg0, %arg1 : i32
    %32 = arith.andi %30, %31 : i1
    %33 = arith.extui %32 : i1 to i32
    %c0_i32_18 = arith.constant 0 : i32
    %34 = arith.cmpi ne, %33, %c0_i32_18 : i32
    scf.if %34 {
      %c256_i32 = arith.constant 256 : i32
      %35 = arith.muli %arg0, %c256_i32 : i32
      %36 = tpu.iota {dimensions = array<i32: 0>} : vector<256x256xi32>
      %37 = vector.broadcast %35 : i32 to vector<256x256xi32>
      %38 = arith.addi %37, %36 : vector<256x256xi32>
      %c256_i32_19 = arith.constant 256 : i32
      %39 = arith.muli %arg1, %c256_i32_19 : i32
      %40 = tpu.iota {dimensions = array<i32: 1>} : vector<256x256xi32>
      %41 = vector.broadcast %39 : i32 to vector<256x256xi32>
      %42 = arith.addi %41, %40 : vector<256x256xi32>
      %c0_20 = arith.constant 0 : index
      %c0_21 = arith.constant 0 : index
      %43 = vector.load %arg9[%c0_20, %c0_21] : memref<256x256xf32, #tpu.memory_space<vmem>>, vector<256x256xf32>
      %44 = arith.cmpi eq, %38, %42 : vector<256x256xi32>
      %c0_22 = arith.constant 0 : index
      %45 = memref.load %arg4[%c0_22] : memref<1xf32, #tpu.memory_space<smem>>
      %cst_23 = arith.constant 0.000000e+00 : f32
      %46 = vector.broadcast %45 : f32 to vector<256x256xf32>
      %47 = vector.broadcast %cst_23 : f32 to vector<256x256xf32>
      %48 = arith.select %44, %46, %47 : vector<256x256xi1>, vector<256x256xf32>
      %49 = arith.addf %43, %48 : vector<256x256xf32>
      %c0_24 = arith.constant 0 : index
      %c0_25 = arith.constant 0 : index
      %50 = vector.load %arg9[%c0_24, %c0_25] : memref<256x256xf32, #tpu.memory_space<vmem>>, vector<256x256xf32>
      tpu.vector_store %arg9[%c0_24, %c0_25], %49 {strides = array<i32>} : memref<256x256xf32, #tpu.memory_space<vmem>>, vector<256x256xf32>,
    } else {
    }
    return
  }
  func.func @transform_0(%arg0: i32, %arg1: i32, %arg2: i32) -> (i32, i32) {
    %c0_i32 = arith.constant 0 : i32
    %c0_i32_0 = arith.constant 0 : i32
    %c0_i32_1 = arith.constant 0 : i32
    return %c0_i32, %c0_i32_0 : i32, i32
  }
  func.func @transform_1(%arg0: i32, %arg1: i32, %arg2: i32) -> i32 {
    %c0_i32 = arith.constant 0 : i32
    %c0_i32_0 = arith.constant 0 : i32
    return %c0_i32 : i32
  }
  func.func @transform_2(%arg0: i32, %arg1: i32, %arg2: i32) -> (i32, i32, i32) {
    %c0_i32 = arith.constant 0 : i32
    %c0_i32_0 = arith.constant 0 : i32
    return %arg2, %arg0, %c0_i32 : i32, i32, i32
  }
  func.func @transform_3(%arg0: i32, %arg1: i32, %arg2: i32) -> (i32, i32, i32) {
    %c0_i32 = arith.constant 0 : i32
    %c0_i32_0 = arith.constant 0 : i32
    return %arg2, %arg1, %c0_i32 : i32, i32, i32
  }
  func.func @transform_4(%arg0: i32, %arg1: i32, %arg2: i32) -> (i32, i32, i32) {
    %c0_i32 = arith.constant 0 : i32
    %c0_i32_0 = arith.constant 0 : i32
    return %arg2, %arg0, %c0_i32 : i32, i32, i32
  }
  func.func @transform_5(%arg0: i32, %arg1: i32, %arg2: i32) -> (i32, i32, i32) {
    %c0_i32 = arith.constant 0 : i32
    %c0_i32_0 = arith.constant 0 : i32
    return %arg2, %c0_i32, %arg1 : i32, i32, i32
  }
  func.func @transform_6(%arg0: i32, %arg1: i32, %arg2: i32) -> (i32, i32) {
    %c0_i32 = arith.constant 0 : i32
    return %arg0, %arg1 : i32, i32
  }
}

</mosaic_0001>

<llo_original>
// kernel: tpu_custom_call.1
$region0: #{tpu_custom_call.1}
  #allocation0 [shape = 'u32[]', space=smem, size = 0x4, offset = 0x4, fixed_abs, tag = 'smem constant byte address 0x4 - core index']
  #allocation1 [shape = 'u32[72,128]{1,0:T(1,128)}', space=vmem, size = 0x9000, scoped, tag = 'internal scratch']
  #allocation2 [shape = 'f32[1]{0:T(128)S(6)}', space=smem, size = 0x200, scoped, tag = 'scoped memory for tpu_custom_call.1']
  %s0 = inlined_call_operand.vmem [shape: f32[2,4], index: 0, kind: input, shape index: {}]
  %s1 = inlined_call_operand.<no memory space> [shape: f32[1], index: 1, kind: input, shape index: {}]
  %s2 = inlined_call_operand.vmem [shape: f32[2,512,32], index: 2, kind: input, shape index: {}]
  %s3 = inlined_call_operand.vmem [shape: f32[2,512,32], index: 3, kind: input, shape index: {}]
  %s4 = inlined_call_operand.vmem [shape: f32[2,512,1], index: 4, kind: input, shape index: {}]
  %s5 = inlined_call_operand.vmem [shape: f32[2,1,512], index: 5, kind: input, shape index: {}]
  %s6 = inlined_call_operand.hbm [shape: f32[512,512], index: 6, kind: output, shape index: {}]
  %s7 = sld [smem:[#allocation0]]
  $region69: #{tpu_custom_call.1} parent=0
    _
  %s9 = ssub.s32 1, %s7
  %s10 = scalar_select 0, %s9, %s7
  %11 = sst [smem:[#allocation2]] %s1
  $region1: #{tpu_custom_call.1} parent=0
    #allocation3 [shape = 'u8[1024]{0}', space=smem, size = 0x400, scoped, tag = 'input window, operand 0, single buffered']
    #allocation4 [shape = 's32[2]{0}', space=sflag, size = 0x8, scoped, tag = 'scoped memory for tpu_custom_call.1']
    #allocation5 [shape = 's32[2]{0}', space=sflag, size = 0x8, scoped, tag = 'scoped memory for tpu_custom_call.1']
    #allocation6 [shape = 'u8[524288]{0}', space=vmem, size = 0x80000, scoped, tag = 'output window, operand 0']
    %12 = vsyncpa [#allocation5], 0
    %13 = vsyncpa [#allocation4], 0
    %s14 = scalar_lea.sflag [#allocation4], 1
    %15 = vsyncpa %s14, 0
    loop: start=0, step=1, limit=10
    $region2: #{tpu_custom_call.1} parent=1 // loop_pre_header
      _
    $region3: #{tpu_custom_call.1} parent=1 // loop_header
      %s17 = sphi 0, %s21
      %p18 = scmp.ge.s32.totalorder %s17, 10
      %s24 = sphi 0, %s43
      %s25 = sphi 0, %s39
      %s26 = sphi 0, %s35
      %s27 = sphi 0, %s24
      %s28 = sphi 0, %s25
      %s29 = sphi 0, %s26
      %s30 = sphi 0, %s27
      %s31 = sphi 0, %s28
      %s32 = sphi 0, %s29
      %s44 = sphi 0, %s44
      %s46 = sphi 0, %s44
      %s47 = sphi 0, %s46
      %s61 = sphi 0, %s47
      %s65 = sphi 0, %s65
      %s67 = sphi 0, %s65
      %s68 = sphi 0, %s67
      %s82 = sphi 0, %s68
      %s90 = sphi 0, %s92
      %s93 = sphi 0, %s90
      %s94 = sphi 0, %s93
      %s110 = sphi 0, %s94
      %s118 = sphi 0, %s120
      %s121 = sphi 0, %s118
      %s122 = sphi 0, %s121
      %s138 = sphi 0, %s122
      %s146 = sphi 0, %s148
      %s149 = sphi 0, %s146
      %s150 = sphi 0, %s149
      %s166 = sphi 0, %s150
      %s174 = sphi 0, %s176
      %s177 = sphi 0, %s174
      %s178 = sphi 0, %s177
      %s194 = sphi 0, %s178
      %s202 = sphi 0, %s204
      %s205 = sphi 0, %s202
      %s206 = sphi 0, %s205
      %s222 = sphi 0, %s206
    $region4: #{tpu_custom_call.1} parent=1 // loop_header_branch
      %20 = sbr.rel (%p18) target = $region8
    $region5: #{tpu_custom_call.1} parent=1 // loop_body
      %s22 = ssub.s32 %s17, 1
      %s23 = ssub.s32 %s17, 2
      %s33 = sadd.s32 1, %s26
      %p34 = scmp.ge.s32.totalorder %s33, 2
      %s35 = scalar_select %p34, 0, %s33
      %s36 = sadd.s32 1, %s25
      %s37 = scalar_select %p34, %s36, %s25
      %p38 = scmp.ge.s32.totalorder %s37, 2
      %s39 = scalar_select %p38, 0, %s37
      %s40 = sadd.s32 1, %s24
      %s41 = scalar_select %p38, %s40, %s24
      %p42 = scmp.ge.s32.totalorder %s41, 2
      %s43 = scalar_select %p42, 0, %s41
      %s45 = sadd.s32 %s44, 1
      %p48 = scmp.eq.s32.totalorder %s17, 7
      %p49 = scmp.ne.s32.totalorder %s44, %s46
      %p50 = scmp.eq.s32.totalorder %s17, 0
      %p51 = por %p49, %p50
      %p52 = scmp.ne.s32.totalorder %s44, %s46
      %p53 = scmp.eq.s32.totalorder %s22, 7
      %p54 = por %p52, %p53
      %p55 = scmp.ne.s32.totalorder %s46, %s47
      %p56 = scmp.eq.s32.totalorder %s22, 0
      %p57 = por %p55, %p56
      %p58 = scmp.ne.s32.totalorder %s46, %s47
      %p59 = scmp.eq.s32.totalorder %s23, 7
      %p60 = por %p58, %p59
      %p62 = scmp.ne.s32.totalorder %s47, %s61
      %p63 = scmp.eq.s32.totalorder %s23, 0
      %p64 = por %p62, %p63
      %s66 = sadd.s32 %s65, 1
      %p69 = scmp.eq.s32.totalorder %s17, 7
      %p70 = scmp.ne.s32.totalorder %s65, %s67
      %p71 = scmp.eq.s32.totalorder %s17, 0
      %p72 = por %p70, %p71
      %p73 = scmp.ne.s32.totalorder %s65, %s67
      %p74 = scmp.eq.s32.totalorder %s22, 7
      %p75 = por %p73, %p74
      %p76 = scmp.ne.s32.totalorder %s67, %s68
      %p77 = scmp.eq.s32.totalorder %s22, 0
      %p78 = por %p76, %p77
      %p79 = scmp.ne.s32.totalorder %s67, %s68
      %p80 = scmp.eq.s32.totalorder %s23, 7
      %p81 = por %p79, %p80
      %p83 = scmp.ne.s32.totalorder %s68, %s82
      %p84 = scmp.eq.s32.totalorder %s23, 0
      %p85 = por %p83, %p84
      %s86 = ssub.s32 %s26, %s35
      %s87 = ssub.s32 %s24, %s43
      %s88 = sor.u32 %s86, %s87
      %p89 = scmp.eq.s32.totalorder %s88, 0
      %s91 = sadd.s32 %s90, 1
      %s92 = scalar_select %p89, %s90, %s91
      %p95 = pneg %p89
      %p96 = scmp.eq.s32.totalorder %s17, 7
      %p97 = por %p95, %p96
      %p98 = scmp.ne.s32.totalorder %s90, %s93
      %p99 = scmp.eq.s32.totalorder %s17, 0
      %p100 = por %p98, %p99
      %p101 = scmp.ne.s32.totalorder %s90, %s93
      %p102 = scmp.eq.s32.totalorder %s22, 7
      %p103 = por %p101, %p102
      %p104 = scmp.ne.s32.totalorder %s93, %s94
      %p105 = scmp.eq.s32.totalorder %s22, 0
      %p106 = por %p104, %p105
      %p107 = scmp.ne.s32.totalorder %s93, %s94
      %p108 = scmp.eq.s32.totalorder %s23, 7
      %p109 = por %p107, %p108
      %p111 = scmp.ne.s32.totalorder %s94, %s110
      %p112 = scmp.eq.s32.totalorder %s23, 0
      %p113 = por %p111, %p112
      %s114 = ssub.s32 %s26, %s35
      %s115 = ssub.s32 %s25, %s39
      %s116 = sor.u32 %s114, %s115
      %p117 = scmp.eq.s32.totalorder %s116, 0
      %s119 = sadd.s32 %s118, 1
      %s120 = scalar_select %p117, %s118, %s119
      %p123 = pneg %p117
      %p124 = scmp.eq.s32.totalorder %s17, 7
      %p125 = por %p123, %p124
      %p126 = scmp.ne.s32.totalorder %s118, %s121
      %p127 = scmp.eq.s32.totalorder %s17, 0
      %p128 = por %p126, %p127
      %p129 = scmp.ne.s32.totalorder %s118, %s121
      %p130 = scmp.eq.s32.totalorder %s22, 7
      %p131 = por %p129, %p130
      %p132 = scmp.ne.s32.totalorder %s121, %s122
      %p133 = scmp.eq.s32.totalorder %s22, 0
      %p134 = por %p132, %p133
      %p135 = scmp.ne.s32.totalorder %s121, %s122
      %p136 = scmp.eq.s32.totalorder %s23, 7
      %p137 = por %p135, %p136
      %p139 = scmp.ne.s32.totalorder %s122, %s138
      %p140 = scmp.eq.s32.totalorder %s23, 0
      %p141 = por %p139, %p140
      %s142 = ssub.s32 %s26, %s35
      %s143 = ssub.s32 %s24, %s43
      %s144 = sor.u32 %s142, %s143
      %p145 = scmp.eq.s32.totalorder %s144, 0
      %s147 = sadd.s32 %s146, 1
      %s148 = scalar_select %p145, %s146, %s147
      %p151 = pneg %p145
      %p152 = scmp.eq.s32.totalorder %s17, 7
      %p153 = por %p151, %p152
      %p154 = scmp.ne.s32.totalorder %s146, %s149
      %p155 = scmp.eq.s32.totalorder %s17, 0
      %p156 = por %p154, %p155
      %p157 = scmp.ne.s32.totalorder %s146, %s149
      %p158 = scmp.eq.s32.totalorder %s22, 7
      %p159 = por %p157, %p158
      %p160 = scmp.ne.s32.totalorder %s149, %s150
      %p161 = scmp.eq.s32.totalorder %s22, 0
      %p162 = por %p160, %p161
      %p163 = scmp.ne.s32.totalorder %s149, %s150
      %p164 = scmp.eq.s32.totalorder %s23, 7
      %p165 = por %p163, %p164
      %p167 = scmp.ne.s32.totalorder %s150, %s166
      %p168 = scmp.eq.s32.totalorder %s23, 0
      %p169 = por %p167, %p168
      %s170 = ssub.s32 %s26, %s35
      %s171 = ssub.s32 %s25, %s39
      %s172 = sor.u32 %s170, %s171
      %p173 = scmp.eq.s32.totalorder %s172, 0
      %s175 = sadd.s32 %s174, 1
      %s176 = scalar_select %p173, %s174, %s175
      %p179 = pneg %p173
      %p180 = scmp.eq.s32.totalorder %s17, 7
      %p181 = por %p179, %p180
      %p182 = scmp.ne.s32.totalorder %s174, %s177
      %p183 = scmp.eq.s32.totalorder %s17, 0
      %p184 = por %p182, %p183
      %p185 = scmp.ne.s32.totalorder %s174, %s177
      %p186 = scmp.eq.s32.totalorder %s22, 7
      %p187 = por %p185, %p186
      %p188 = scmp.ne.s32.totalorder %s177, %s178
      %p189 = scmp.eq.s32.totalorder %s22, 0
      %p190 = por %p188, %p189
      %p191 = scmp.ne.s32.totalorder %s177, %s178
      %p192 = scmp.eq.s32.totalorder %s23, 7
      %p193 = por %p191, %p192
      %p195 = scmp.ne.s32.totalorder %s178, %s194
      %p196 = scmp.eq.s32.totalorder %s23, 0
      %p197 = por %p195, %p196
      %s198 = ssub.s32 %s24, %s43
      %s199 = ssub.s32 %s25, %s39
      %s200 = sor.u32 %s198, %s199
      %p201 = scmp.eq.s32.totalorder %s200, 0
      %s203 = sadd.s32 %s202, 1
      %s204 = scalar_select %p201, %s202, %s203
      %p207 = pneg %p201
      %p208 = scmp.eq.s32.totalorder %s17, 7
      %p209 = por %p207, %p208
      %p210 = scmp.ne.s32.totalorder %s202, %s205
      %p211 = scmp.eq.s32.totalorder %s17, 0
      %p212 = por %p210, %p211
      %p213 = scmp.ne.s32.totalorder %s202, %s205
      %p214 = scmp.eq.s32.totalorder %s22, 7
      %p215 = por %p213, %p214
      %p216 = scmp.ne.s32.totalorder %s205, %s206
      %p217 = scmp.eq.s32.totalorder %s22, 0
      %p218 = por %p216, %p217
      %p219 = scmp.ne.s32.totalorder %s205, %s206
      %p220 = scmp.eq.s32.totalorder %s23, 7
      %p221 = por %p219, %p220
      %p223 = scmp.ne.s32.totalorder %s206, %s222
      %p224 = scmp.eq.s32.totalorder %s23, 0
      %p225 = por %p223, %p224
      %p226 = scmp.le.s32.totalorder 1, %s17
      %p227 = scmp.lt.s32.totalorder %s17, 9
      %p228 = pnand %p226, %p227
      %p229 = pneg %p228
      // Predicated region
      $region9: #{tpu_custom_call.1} parent=5 // pred_check
        _
      $region10: #{tpu_custom_call.1} parent=5 // pred_check_branch
        %231 = sbr.rel (%p228) target = $region12
      $region11: #{tpu_custom_call.1} parent=5 // pred_region
        %s232 = ssub.s32 %s17, 1
        // Predicated region
        $region13: #{tpu_custom_call.1} parent=11 // pred_check
          %p233 = pneg %p57
        $region14: #{tpu_custom_call.1} parent=11 // pred_check_branch
          %235 = sbr.rel (%p233) target = $region16
        $region15: #{tpu_custom_call.1} parent=11 // pred_region
          %237 = vsyncadd [#allocation5], 0
          %s239 = sshll.u32 %s0, 4
          %s240 = int_to_ptr.vmem [resolvable:$true] %s239
          %242 = dma.vmem_to_smem %s240, 32, [#allocation3], [#allocation5]
        $region16: #{tpu_custom_call.1} parent=11 // pred_fallthru
          _
        // Predicated region
        $region17: #{tpu_custom_call.1} parent=11 // pred_check
          %p243 = pneg %p78
        $region18: #{tpu_custom_call.1} parent=11 // pred_check_branch
          %245 = sbr.rel (%p243) target = $region20
        $region19: #{tpu_custom_call.1} parent=11 // pred_region
          _
        $region20: #{tpu_custom_call.1} parent=11 // pred_fallthru
          _
      $region12: #{tpu_custom_call.1} parent=5 // pred_fallthru
        _
      %p246 = scmp.lt.s32.totalorder %s17, 8
      // Predicated region
      $region21: #{tpu_custom_call.1} parent=5 // pred_check
        %p247 = pneg %p246
      $region22: #{tpu_custom_call.1} parent=5 // pred_check_branch
        %249 = sbr.rel (%p247) target = $region24
      $region23: #{tpu_custom_call.1} parent=5 // pred_region
        // Predicated region
        $region25: #{tpu_custom_call.1} parent=23 // pred_check
          %p250 = pneg %p100
        $region26: #{tpu_custom_call.1} parent=23 // pred_check_branch
          %252 = sbr.rel (%p250) target = $region28
        $region27: #{tpu_custom_call.1} parent=23 // pred_region
          %s253 = smul.u32 32, %s24
          %p254 = scmp.lt.s32.totalorder %s26, 1
          %s255 = scalar_select %p254, %s26, 1
          %p256 = scmp.lt.s32.totalorder %s253, 63
          %s257 = scalar_select %p256, %s253, 63
          %s258 = smul.addr %s255, 64
          %s259 = sadd.s32 %s257, %s258
          %s260 = smul.addr %s259, 8
          %s261 = scalar_lea.vmem %s2, %s260
          %s262 = smul.u32 32, %s24
        $region28: #{tpu_custom_call.1} parent=23 // pred_fallthru
          _
        // Predicated region
        $region29: #{tpu_custom_call.1} parent=23 // pred_check
          %p263 = pneg %p128
        $region30: #{tpu_custom_call.1} parent=23 // pred_check_branch
          %265 = sbr.rel (%p263) target = $region32
        $region31: #{tpu_custom_call.1} parent=23 // pred_region
          %s266 = smul.u32 32, %s25
          %p267 = scmp.lt.s32.totalorder %s26, 1
          %s268 = scalar_select %p267, %s26, 1
          %p269 = scmp.lt.s32.totalorder %s266, 63
          %s270 = scalar_select %p269, %s266, 63
          %s271 = smul.addr %s268, 64
          %s272 = sadd.s32 %s270, %s271
          %s273 = smul.addr %s272, 8
          %s274 = scalar_lea.vmem %s3, %s273
          %s275 = smul.u32 32, %s25
        $region32: #{tpu_custom_call.1} parent=23 // pred_fallthru
          _
        // Predicated region
        $region33: #{tpu_custom_call.1} parent=23 // pred_check
          %p276 = pneg %p156
        $region34: #{tpu_custom_call.1} parent=23 // pred_check_branch
          %278 = sbr.rel (%p276) target = $region36
        $region35: #{tpu_custom_call.1} parent=23 // pred_region
          %s279 = smul.u32 32, %s24
          %p280 = scmp.lt.s32.totalorder %s26, 1
          %s281 = scalar_select %p280, %s26, 1
          %p282 = scmp.lt.s32.totalorder %s279, 63
          %s283 = scalar_select %p282, %s279, 63
          %s284 = smul.addr %s281, 64
          %s285 = sadd.s32 %s283, %s284
          %s286 = smul.addr %s285, 8
          %s287 = scalar_lea.vmem %s4, %s286
          %s288 = smul.u32 32, %s24
        $region36: #{tpu_custom_call.1} parent=23 // pred_fallthru
          _
        // Predicated region
        $region37: #{tpu_custom_call.1} parent=23 // pred_check
          %p289 = pneg %p184
        $region38: #{tpu_custom_call.1} parent=23 // pred_check_branch
          %291 = sbr.rel (%p289) target = $region40
        $region39: #{tpu_custom_call.1} parent=23 // pred_region
          %s292 = smul.u32 2, %s25
          %p293 = scmp.lt.s32.totalorder %s26, 1
          %s294 = scalar_select %p293, %s26, 1
          %p295 = scmp.lt.s32.totalorder %s292, 3
          %s296 = scalar_select %p295, %s292, 3
          %s297 = smul.addr %s294, 4
          %s298 = sadd.s32 %s296, %s297
          %s299 = scalar_lea.vmem %s5, %s298
          %s300 = smul.u32 2, %s25
        $region40: #{tpu_custom_call.1} parent=23 // pred_fallthru
          _
      $region24: #{tpu_custom_call.1} parent=5 // pred_fallthru
        _
      %p301 = scmp.le.s32.totalorder 1, %s17
      %p302 = scmp.lt.s32.totalorder %s17, 9
      %p303 = pnand %p301, %p302
      %p304 = pneg %p303
      // Predicated region
      $region41: #{tpu_custom_call.1} parent=5 // pred_check
        _
      $region42: #{tpu_custom_call.1} parent=5 // pred_check_branch
        %306 = sbr.rel (%p303) target = $region44
      $region43: #{tpu_custom_call.1} parent=5 // pred_region
        %s307 = ssub.s32 %s17, 1
        // Predicated region
        $region45: #{tpu_custom_call.1} parent=43 // pred_check
          %p308 = pneg %p57
        $region46: #{tpu_custom_call.1} parent=43 // pred_check_branch
          %310 = sbr.rel (%p308) target = $region48
        $region47: #{tpu_custom_call.1} parent=43 // pred_region
          %312 = dma.done [#allocation5], 32
        $region48: #{tpu_custom_call.1} parent=43 // pred_fallthru
          _
        %313 = sfence
        %p314 = pneg %p57
        %p315 = pneg %p54
        %p316 = pneg %p78
        %p317 = pneg %p75
        %s318 = smul.u32 32, %s27
        %p319 = scmp.lt.s32.totalorder %s29, 1
        %s320 = scalar_select %p319, %s29, 1
        %p321 = scmp.lt.s32.totalorder %s318, 63
        %s322 = scalar_select %p321, %s318, 63
        %s323 = smul.addr %s320, 64
        %s324 = sadd.s32 %s322, %s323
        %s325 = smul.addr %s324, 8
        %s326 = scalar_lea.vmem %s2, %s325
        %p327 = pneg %p106
        %p328 = pneg %p103
        %s329 = smul.u32 32, %s28
        %p330 = scmp.lt.s32.totalorder %s29, 1
        %s331 = scalar_select %p330, %s29, 1
        %p332 = scmp.lt.s32.totalorder %s329, 63
        %s333 = scalar_select %p332, %s329, 63
        %s334 = smul.addr %s331, 64
        %s335 = sadd.s32 %s333, %s334
        %s336 = smul.addr %s335, 8
        %s337 = scalar_lea.vmem %s3, %s336
        %p338 = pneg %p134
        %p339 = pneg %p131
        %s340 = smul.u32 32, %s27
        %p341 = scmp.lt.s32.totalorder %s29, 1
        %s342 = scalar_select %p341, %s29, 1
        %p343 = scmp.lt.s32.totalorder %s340, 63
        %s344 = scalar_select %p343, %s340, 63
        %s345 = smul.addr %s342, 64
        %s346 = sadd.s32 %s344, %s345
        %s347 = smul.addr %s346, 8
        %s348 = scalar_lea.vmem %s4, %s347
        %p349 = pneg %p162
        %p350 = pneg %p159
        %s351 = smul.u32 2, %s28
        %p352 = scmp.lt.s32.totalorder %s29, 1
        %s353 = scalar_select %p352, %s29, 1
        %p354 = scmp.lt.s32.totalorder %s351, 3
        %s355 = scalar_select %p354, %s351, 3
        %s356 = smul.addr %s353, 4
        %s357 = sadd.s32 %s355, %s356
        %s358 = scalar_lea.vmem %s5, %s357
        %p359 = pneg %p190
        %p360 = pneg %p187
        %p361 = pneg %p218
        %p362 = pneg %p215
        %s363 = sand.u32 %s205, 1
        %s364 = scalar_lea.sflag [#allocation4], %s363
        %s365 = sand.u32 %s205, 1
        %s366 = smul.addr %s365, 512
        %s367 = scalar_lea.vmem [#allocation6], %s366
        %s368 = smul.u32 32, %s27
        %p369 = scmp.lt.s32.totalorder %s29, 1
        %s370 = scalar_select %p369, %s29, 1
        %p371 = scmp.lt.s32.totalorder %s368, 63
        %s372 = scalar_select %p371, %s368, 63
        %s373 = smul.addr %s370, 64
        %s374 = sadd.s32 %s372, %s373
        %s375 = smul.addr %s374, 8
        %s376 = scalar_lea.vmem %s2, %s375
        %s377 = smul.u32 32, %s27
        %s378 = smul.u32 32, %s28
        %p379 = scmp.lt.s32.totalorder %s29, 1
        %s380 = scalar_select %p379, %s29, 1
        %p381 = scmp.lt.s32.totalorder %s378, 63
        %s382 = scalar_select %p381, %s378, 63
        %s383 = smul.addr %s380, 64
        %s384 = sadd.s32 %s382, %s383
        %s385 = smul.addr %s384, 8
        %s386 = scalar_lea.vmem %s3, %s385
        %s387 = smul.u32 32, %s28
        %s388 = smul.u32 32, %s27
        %p389 = scmp.lt.s32.totalorder %s29, 1
        %s390 = scalar_select %p389, %s29, 1
        %p391 = scmp.lt.s32.totalorder %s388, 63
        %s392 = scalar_select %p391, %s388, 63
        %s393 = smul.addr %s390, 64
        %s394 = sadd.s32 %s392, %s393
        %s395 = smul.addr %s394, 8
        %s396 = scalar_lea.vmem %s4, %s395
        %s397 = smul.u32 32, %s27
        %s398 = smul.u32 2, %s28
        %p399 = scmp.lt.s32.totalorder %s29, 1
        %s400 = scalar_select %p399, %s29, 1
        %p401 = scmp.lt.s32.totalorder %s398, 3
        %s402 = scalar_select %p401, %s398, 3
        %s403 = smul.addr %s400, 4
        %s404 = sadd.s32 %s402, %s403
        %s405 = scalar_lea.vmem %s5, %s404
        %s406 = smul.u32 2, %s28
        %s407 = smul.u32 32, %s27
        %s408 = smul.u32 2, %s28
        %p409 = scmp.eq.s32.totalorder %s29, 0
        // Predicated region
        $region49: #{tpu_custom_call.1} parent=43 // pred_check
          %p410 = pneg %p409
        $region50: #{tpu_custom_call.1} parent=43 // pred_check_branch
          %412 = sbr.rel (%p410) target = $region52
        $region51: #{tpu_custom_call.1} parent=43 // pred_region
          %413 = vst [vmem:[%s367] sm:$0xff] 0.0
          %414 = vst [vmem:[%s367 + $0x8] sm:$0xff] 0.0
          %415 = vst [vmem:[%s367 + $0x10] sm:$0xff] 0.0
          %416 = vst [vmem:[%s367 + $0x18] sm:$0xff] 0.0
          %417 = vst [vmem:[%s367 + $0x20] sm:$0xff] 0.0
          %418 = vst [vmem:[%s367 + $0x28] sm:$0xff] 0.0
          %419 = vst [vmem:[%s367 + $0x30] sm:$0xff] 0.0
          %420 = vst [vmem:[%s367 + $0x38] sm:$0xff] 0.0
          %421 = vst [vmem:[%s367 + $0x40] sm:$0xff] 0.0
          %422 = vst [vmem:[%s367 + $0x48] sm:$0xff] 0.0
          %423 = vst [vmem:[%s367 + $0x50] sm:$0xff] 0.0
          %424 = vst [vmem:[%s367 + $0x58] sm:$0xff] 0.0
          %425 = vst [vmem:[%s367 + $0x60] sm:$0xff] 0.0
          %426 = vst [vmem:[%s367 + $0x68] sm:$0xff] 0.0
          %427 = vst [vmem:[%s367 + $0x70] sm:$0xff] 0.0
          %428 = vst [vmem:[%s367 + $0x78] sm:$0xff] 0.0
          %429 = vst [vmem:[%s367 + $0x80] sm:$0xff] 0.0
          %430 = vst [vmem:[%s367 + $0x88] sm:$0xff] 0.0
          %431 = vst [vmem:[%s367 + $0x90] sm:$0xff] 0.0
          %432 = vst [vmem:[%s367 + $0x98] sm:$0xff] 0.0
          %433 = vst [vmem:[%s367 + $0xa0] sm:$0xff] 0.0
          %434 = vst [vmem:[%s367 + $0xa8] sm:$0xff] 0.0
          %435 = vst [vmem:[%s367 + $0xb0] sm:$0xff] 0.0
          %436 = vst [vmem:[%s367 + $0xb8] sm:$0xff] 0.0
          %437 = vst [vmem:[%s367 + $0xc0] sm:$0xff] 0.0
          %438 = vst [vmem:[%s367 + $0xc8] sm:$0xff] 0.0
          %439 = vst [vmem:[%s367 + $0xd0] sm:$0xff] 0.0
          %440 = vst [vmem:[%s367 + $0xd8] sm:$0xff] 0.0
          %441 = vst [vmem:[%s367 + $0xe0] sm:$0xff] 0.0
          %442 = vst [vmem:[%s367 + $0xe8] sm:$0xff] 0.0
          %443 = vst [vmem:[%s367 + $0xf0] sm:$0xff] 0.0
          %444 = vst [vmem:[%s367 + $0xf8] sm:$0xff] 0.0
          %445 = vst [vmem:[%s367 + $0x100] sm:$0xff] 0.0
          %446 = vst [vmem:[%s367 + $0x108] sm:$0xff] 0.0
          %447 = vst [vmem:[%s367 + $0x110] sm:$0xff] 0.0
          %448 = vst [vmem:[%s367 + $0x118] sm:$0xff] 0.0
          %449 = vst [vmem:[%s367 + $0x120] sm:$0xff] 0.0
          %450 = vst [vmem:[%s367 + $0x128] sm:$0xff] 0.0
          %451 = vst [vmem:[%s367 + $0x130] sm:$0xff] 0.0
          %452 = vst [vmem:[%s367 + $0x138] sm:$0xff] 0.0
          %453 = vst [vmem:[%s367 + $0x140] sm:$0xff] 0.0
          %454 = vst [vmem:[%s367 + $0x148] sm:$0xff] 0.0
          %455 = vst [vmem:[%s367 + $0x150] sm:$0xff] 0.0
          %456 = vst [vmem:[%s367 + $0x158] sm:$0xff] 0.0
          %457 = vst [vmem:[%s367 + $0x160] sm:$0xff] 0.0
          %458 = vst [vmem:[%s367 + $0x168] sm:$0xff] 0.0
          %459 = vst [vmem:[%s367 + $0x170] sm:$0xff] 0.0
          %460 = vst [vmem:[%s367 + $0x178] sm:$0xff] 0.0
          %461 = vst [vmem:[%s367 + $0x180] sm:$0xff] 0.0
          %462 = vst [vmem:[%s367 + $0x188] sm:$0xff] 0.0
          %463 = vst [vmem:[%s367 + $0x190] sm:$0xff] 0.0
          %464 = vst [vmem:[%s367 + $0x198] sm:$0xff] 0.0
          %465 = vst [vmem:[%s367 + $0x1a0] sm:$0xff] 0.0
          %466 = vst [vmem:[%s367 + $0x1a8] sm:$0xff] 0.0
          %467 = vst [vmem:[%s367 + $0x1b0] sm:$0xff] 0.0
          %468 = vst [vmem:[%s367 + $0x1b8] sm:$0xff] 0.0
          %469 = vst [vmem:[%s367 + $0x1c0] sm:$0xff] 0.0
          %470 = vst [vmem:[%s367 + $0x1c8] sm:$0xff] 0.0
          %471 = vst [vmem:[%s367 + $0x1d0] sm:$0xff] 0.0
          %472 = vst [vmem:[%s367 + $0x1d8] sm:$0xff] 0.0
          %473 = vst [vmem:[%s367 + $0x1e0] sm:$0xff] 0.0
          %474 = vst [vmem:[%s367 + $0x1e8] sm:$0xff] 0.0
          %475 = vst [vmem:[%s367 + $0x1f0] sm:$0xff] 0.0
          %476 = vst [vmem:[%s367 + $0x1f8] sm:$0xff] 0.0
        $region52: #{tpu_custom_call.1} parent=43 // pred_fallthru
          _
        %s477 = smul.u32 %s29, 128
        %s478 = sld [smem:[#allocation3 + %s477]]
        %s479 = sadd.s32 %s477, 1
        %s480 = sld [smem:[#allocation3 + %s479]]
        %v481 = vld [vmem:[%s376] sm:$0xff]
        %v482 = vld [vmem:[%s376 + $0x8] sm:$0xff]
        %v483 = vld [vmem:[%s376 + $0x10] sm:$0xff]
        %v484 = vld [vmem:[%s376 + $0x18] sm:$0xff]
        %v485 = vld [vmem:[%s376 + $0x20] sm:$0xff]
        %v486 = vld [vmem:[%s376 + $0x28] sm:$0xff]
        %v487 = vld [vmem:[%s376 + $0x30] sm:$0xff]
        %v488 = vld [vmem:[%s376 + $0x38] sm:$0xff]
        %v489 = vld [vmem:[%s376 + $0x40] sm:$0xff]
        %v490 = vld [vmem:[%s376 + $0x48] sm:$0xff]
        %v491 = vld [vmem:[%s376 + $0x50] sm:$0xff]
        %v492 = vld [vmem:[%s376 + $0x58] sm:$0xff]
        %v493 = vld [vmem:[%s376 + $0x60] sm:$0xff]
        %v494 = vld [vmem:[%s376 + $0x68] sm:$0xff]
        %v495 = vld [vmem:[%s376 + $0x70] sm:$0xff]
        %v496 = vld [vmem:[%s376 + $0x78] sm:$0xff]
        %v497 = vld [vmem:[%s376 + $0x80] sm:$0xff]
        %v498 = vld [vmem:[%s376 + $0x88] sm:$0xff]
        %v499 = vld [vmem:[%s376 + $0x90] sm:$0xff]
        %v500 = vld [vmem:[%s376 + $0x98] sm:$0xff]
        %v501 = vld [vmem:[%s376 + $0xa0] sm:$0xff]
        %v502 = vld [vmem:[%s376 + $0xa8] sm:$0xff]
        %v503 = vld [vmem:[%s376 + $0xb0] sm:$0xff]
        %v504 = vld [vmem:[%s376 + $0xb8] sm:$0xff]
        %v505 = vld [vmem:[%s376 + $0xc0] sm:$0xff]
        %v506 = vld [vmem:[%s376 + $0xc8] sm:$0xff]
        %v507 = vld [vmem:[%s376 + $0xd0] sm:$0xff]
        %v508 = vld [vmem:[%s376 + $0xd8] sm:$0xff]
        %v509 = vld [vmem:[%s376 + $0xe0] sm:$0xff]
        %v510 = vld [vmem:[%s376 + $0xe8] sm:$0xff]
        %v511 = vld [vmem:[%s376 + $0xf0] sm:$0xff]
        %v512 = vld [vmem:[%s376 + $0xf8] sm:$0xff]
        %v513 = vld [vmem:[%s386] sm:$0xff]
        %v514 = vld [vmem:[%s386 + $0x8] sm:$0xff]
        %v515 = vld [vmem:[%s386 + $0x10] sm:$0xff]
        %v516 = vld [vmem:[%s386 + $0x18] sm:$0xff]
        %v517 = vld [vmem:[%s386 + $0x20] sm:$0xff]
        %v518 = vld [vmem:[%s386 + $0x28] sm:$0xff]
        %v519 = vld [vmem:[%s386 + $0x30] sm:$0xff]
        %v520 = vld [vmem:[%s386 + $0x38] sm:$0xff]
        %v521 = vld [vmem:[%s386 + $0x40] sm:$0xff]
        %v522 = vld [vmem:[%s386 + $0x48] sm:$0xff]
        %v523 = vld [vmem:[%s386 + $0x50] sm:$0xff]
        %v524 = vld [vmem:[%s386 + $0x58] sm:$0xff]
        %v525 = vld [vmem:[%s386 + $0x60] sm:$0xff]
        %v526 = vld [vmem:[%s386 + $0x68] sm:$0xff]
        %v527 = vld [vmem:[%s386 + $0x70] sm:$0xff]
        %v528 = vld [vmem:[%s386 + $0x78] sm:$0xff]
        %v529 = vld [vmem:[%s386 + $0x80] sm:$0xff]
        %v530 = vld [vmem:[%s386 + $0x88] sm:$0xff]
        %v531 = vld [vmem:[%s386 + $0x90] sm:$0xff]
        %v532 = vld [vmem:[%s386 + $0x98] sm:$0xff]
        %v533 = vld [vmem:[%s386 + $0xa0] sm:$0xff]
        %v534 = vld [vmem:[%s386 + $0xa8] sm:$0xff]
        %v535 = vld [vmem:[%s386 + $0xb0] sm:$0xff]
        %v536 = vld [vmem:[%s386 + $0xb8] sm:$0xff]
        %v537 = vld [vmem:[%s386 + $0xc0] sm:$0xff]
        %v538 = vld [vmem:[%s386 + $0xc8] sm:$0xff]
        %v539 = vld [vmem:[%s386 + $0xd0] sm:$0xff]
        %v540 = vld [vmem:[%s386 + $0xd8] sm:$0xff]
        %v541 = vld [vmem:[%s386 + $0xe0] sm:$0xff]
        %v542 = vld [vmem:[%s386 + $0xe8] sm:$0xff]
        %v543 = vld [vmem:[%s386 + $0xf0] sm:$0xff]
        %v544 = vld [vmem:[%s386 + $0xf8] sm:$0xff]
        %vm545 = vcmask 261120
        %v547 = vsel %vm545, %v481, 0
        %v550 = vsel %vm545, %v482, 0
        %v553 = vsel %vm545, %v483, 0
        %v556 = vsel %vm545, %v484, 0
        %v559 = vsel %vm545, %v485, 0
        %v562 = vsel %vm545, %v486, 0
        %v565 = vsel %vm545, %v487, 0
        %v568 = vsel %vm545, %v488, 0
        %v571 = vsel %vm545, %v489, 0
        %v574 = vsel %vm545, %v490, 0
        %v577 = vsel %vm545, %v491, 0
        %v580 = vsel %vm545, %v492, 0
        %v583 = vsel %vm545, %v493, 0
        %v586 = vsel %vm545, %v494, 0
        %v589 = vsel %vm545, %v495, 0
        %v592 = vsel %vm545, %v496, 0
        %v595 = vsel %vm545, %v497, 0
        %v598 = vsel %vm545, %v498, 0
        %v601 = vsel %vm545, %v499, 0
        %v604 = vsel %vm545, %v500, 0
        %v607 = vsel %vm545, %v501, 0
        %v610 = vsel %vm545, %v502, 0
        %v613 = vsel %vm545, %v503, 0
        %v616 = vsel %vm545, %v504, 0
        %v619 = vsel %vm545, %v505, 0
        %v622 = vsel %vm545, %v506, 0
        %v625 = vsel %vm545, %v507, 0
        %v628 = vsel %vm545, %v508, 0
        %v631 = vsel %vm545, %v509, 0
        %v634 = vsel %vm545, %v510, 0
        %v637 = vsel %vm545, %v511, 0
        %v640 = vsel %vm545, %v512, 0
        %v643 = vsel %vm545, %v513, 0
        %v646 = vsel %vm545, %v514, 0
        %v649 = vsel %vm545, %v515, 0
        %v652 = vsel %vm545, %v516, 0
        %v655 = vsel %vm545, %v517, 0
        %v658 = vsel %vm545, %v518, 0
        %v661 = vsel %vm545, %v519, 0
        %v664 = vsel %vm545, %v520, 0
        %v667 = vsel %vm545, %v521, 0
        %v670 = vsel %vm545, %v522, 0
        %v673 = vsel %vm545, %v523, 0
        %v676 = vsel %vm545, %v524, 0
        %v679 = vsel %vm545, %v525, 0
        %v682 = vsel %vm545, %v526, 0
        %v685 = vsel %vm545, %v527, 0
        %v688 = vsel %vm545, %v528, 0
        %v691 = vsel %vm545, %v529, 0
        %v694 = vsel %vm545, %v530, 0
        %v697 = vsel %vm545, %v531, 0
        %v700 = vsel %vm545, %v532, 0
        %v703 = vsel %vm545, %v533, 0
        %v706 = vsel %vm545, %v534, 0
        %v709 = vsel %vm545, %v535, 0
        %v712 = vsel %vm545, %v536, 0
        %v715 = vsel %vm545, %v537, 0
        %v718 = vsel %vm545, %v538, 0
        %v721 = vsel %vm545, %v539, 0
        %v724 = vsel %vm545, %v540, 0
        %v727 = vsel %vm545, %v541, 0
        %v730 = vsel %vm545, %v542, 0
        %v733 = vsel %vm545, %v543, 0
        %v736 = vsel %vm545, %v544, 0
        %738 = vmatpush.xpose.msra.mxu0 %v688
        %739 = vmatpush.xpose.msra.mxu0 %v685
        %740 = vmatpush.xpose.msra.mxu0 %v682
        %741 = vmatpush.xpose.msra.mxu0 %v679
        %742 = vmatpush.xpose.msra.mxu0 %v676
        %743 = vmatpush.xpose.msra.mxu0 %v673
        %744 = vmatpush.xpose.msra.mxu0 %v670
        %745 = vmatpush.xpose.msra.mxu0 %v667
        %746 = vmatpush.xpose.msra.mxu0 %v664
        %747 = vmatpush.xpose.msra.mxu0 %v661
        %748 = vmatpush.xpose.msra.mxu0 %v658
        %749 = vmatpush.xpose.msra.mxu0 %v655
        %750 = vmatpush.xpose.msra.mxu0 %v652
        %751 = vmatpush.xpose.msra.mxu0 %v649
        %752 = vmatpush.xpose.msra.mxu0 %v646
        %753 = vmatpush.xpose.msra.mxu0 %v643
        %754 = vmatmul.f32.gmra.mxu0 %v547
        %v755 = vpop.f32.mrf.mxu0
        %v756 = vadd.f32 0.0, %v755
        %757 = vmatmul.f32.gmra.mxu0 %v550
        %v758 = vpop.f32.mrf.mxu0
        %v759 = vadd.f32 0.0, %v758
        %760 = vmatmul.f32.gmra.mxu0 %v553
        %v761 = vpop.f32.mrf.mxu0
        %v762 = vadd.f32 0.0, %v761
        %763 = vmatmul.f32.gmra.mxu0 %v556
        %v764 = vpop.f32.mrf.mxu0
        %v765 = vadd.f32 0.0, %v764
        %766 = vmatmul.f32.gmra.mxu0 %v559
        %v767 = vpop.f32.mrf.mxu0
        %v768 = vadd.f32 0.0, %v767
        %769 = vmatmul.f32.gmra.mxu0 %v562
        %v770 = vpop.f32.mrf.mxu0
        %v771 = vadd.f32 0.0, %v770
        %772 = vmatmul.f32.gmra.mxu0 %v565
        %v773 = vpop.f32.mrf.mxu0
        %v774 = vadd.f32 0.0, %v773
        %775 = vmatmul.f32.gmra.mxu0 %v568
        %v776 = vpop.f32.mrf.mxu0
        %v777 = vadd.f32 0.0, %v776
        %778 = vmatmul.f32.gmra.mxu0 %v571
        %v779 = vpop.f32.mrf.mxu0
        %v780 = vadd.f32 0.0, %v779
        %781 = vmatmul.f32.gmra.mxu0 %v574
        %v782 = vpop.f32.mrf.mxu0
        %v783 = vadd.f32 0.0, %v782
        %784 = vmatmul.f32.gmra.mxu0 %v577
        %v785 = vpop.f32.mrf.mxu0
        %v786 = vadd.f32 0.0, %v785
        %787 = vmatmul.f32.gmra.mxu0 %v580
        %v788 = vpop.f32.mrf.mxu0
        %v789 = vadd.f32 0.0, %v788
        %790 = vmatmul.f32.gmra.mxu0 %v583
        %v791 = vpop.f32.mrf.mxu0
        %v792 = vadd.f32 0.0, %v791
        %793 = vmatmul.f32.gmra.mxu0 %v586
        %v794 = vpop.f32.mrf.mxu0
        %v795 = vadd.f32 0.0, %v794
        %796 = vmatmul.f32.gmra.mxu0 %v589
        %v797 = vpop.f32.mrf.mxu0
        %v798 = vadd.f32 0.0, %v797
        %799 = vmatmul.f32.gmra.mxu0 %v592
        %v800 = vpop.f32.mrf.mxu0
        %v801 = vadd.f32 0.0, %v800
        %802 = vmatmul.f32.gmra.mxu0 %v595
        %v803 = vpop.f32.mrf.mxu0
        %v804 = vadd.f32 0.0, %v803
        %805 = vmatmul.f32.gmra.mxu0 %v598
        %v806 = vpop.f32.mrf.mxu0
        %v807 = vadd.f32 0.0, %v806
        %808 = vmatmul.f32.gmra.mxu0 %v601
        %v809 = vpop.f32.mrf.mxu0
        %v810 = vadd.f32 0.0, %v809
        %811 = vmatmul.f32.gmra.mxu0 %v604
        %v812 = vpop.f32.mrf.mxu0
        %v813 = vadd.f32 0.0, %v812
        %814 = vmatmul.f32.gmra.mxu0 %v607
        %v815 = vpop.f32.mrf.mxu0
        %v816 = vadd.f32 0.0, %v815
        %817 = vmatmul.f32.gmra.mxu0 %v610
        %v818 = vpop.f32.mrf.mxu0
        %v819 = vadd.f32 0.0, %v818
        %820 = vmatmul.f32.gmra.mxu0 %v613
        %v821 = vpop.f32.mrf.mxu0
        %v822 = vadd.f32 0.0, %v821
        %823 = vmatmul.f32.gmra.mxu0 %v616
        %v824 = vpop.f32.mrf.mxu0
        %v825 = vadd.f32 0.0, %v824
        %826 = vmatmul.f32.gmra.mxu0 %v619
        %v827 = vpop.f32.mrf.mxu0
        %v828 = vadd.f32 0.0, %v827
        %829 = vmatmul.f32.gmra.mxu0 %v622
        %v830 = vpop.f32.mrf.mxu0
        %v831 = vadd.f32 0.0, %v830
        %832 = vmatmul.f32.gmra.mxu0 %v625
        %v833 = vpop.f32.mrf.mxu0
        %v834 = vadd.f32 0.0, %v833
        %835 = vmatmul.f32.gmra.mxu0 %v628
        %v836 = vpop.f32.mrf.mxu0
        %v837 = vadd.f32 0.0, %v836
        %838 = vmatmul.f32.gmra.mxu0 %v631
        %v839 = vpop.f32.mrf.mxu0
        %v840 = vadd.f32 0.0, %v839
        %841 = vmatmul.f32.gmra.mxu0 %v634
        %v842 = vpop.f32.mrf.mxu0
        %v843 = vadd.f32 0.0, %v842
        %844 = vmatmul.f32.gmra.mxu0 %v637
        %v845 = vpop.f32.mrf.mxu0
        %v846 = vadd.f32 0.0, %v845
        %847 = vmatmul.f32.gmra.mxu0 %v640
        %v848 = vpop.f32.mrf.mxu0
        %v849 = vadd.f32 0.0, %v848
        %850 = vdwg.mxu0
        %851 = vmatpush.xpose.msra.mxu0 %v736
        %852 = vmatpush.xpose.msra.mxu0 %v733
        %853 = vmatpush.xpose.msra.mxu0 %v730
        %854 = vmatpush.xpose.msra.mxu0 %v727
        %855 = vmatpush.xpose.msra.mxu0 %v724
        %856 = vmatpush.xpose.msra.mxu0 %v721
        %857 = vmatpush.xpose.msra.mxu0 %v718
        %858 = vmatpush.xpose.msra.mxu0 %v715
        %859 = vmatpush.xpose.msra.mxu0 %v712
        %860 = vmatpush.xpose.msra.mxu0 %v709
        %861 = vmatpush.xpose.msra.mxu0 %v706
        %862 = vmatpush.xpose.msra.mxu0 %v703
        %863 = vmatpush.xpose.msra.mxu0 %v700
        %864 = vmatpush.xpose.msra.mxu0 %v697
        %865 = vmatpush.xpose.msra.mxu0 %v694
        %866 = vmatpush.xpose.msra.mxu0 %v691
        %867 = vmatmul.f32.gmra.mxu0 %v547
        %v868 = vpop.f32.mrf.mxu0
        %v869 = vadd.f32 0.0, %v868
        %870 = vmatmul.f32.gmra.mxu0 %v550
        %v871 = vpop.f32.mrf.mxu0
        %v872 = vadd.f32 0.0, %v871
        %873 = vmatmul.f32.gmra.mxu0 %v553
        %v874 = vpop.f32.mrf.mxu0
        %v875 = vadd.f32 0.0, %v874
        %876 = vmatmul.f32.gmra.mxu0 %v556
        %v877 = vpop.f32.mrf.mxu0
        %v878 = vadd.f32 0.0, %v877
        %879 = vmatmul.f32.gmra.mxu0 %v559
        %v880 = vpop.f32.mrf.mxu0
        %v881 = vadd.f32 0.0, %v880
        %882 = vmatmul.f32.gmra.mxu0 %v562
        %v883 = vpop.f32.mrf.mxu0
        %v884 = vadd.f32 0.0, %v883
        %885 = vmatmul.f32.gmra.mxu0 %v565
        %v886 = vpop.f32.mrf.mxu0
        %v887 = vadd.f32 0.0, %v886
        %888 = vmatmul.f32.gmra.mxu0 %v568
        %v889 = vpop.f32.mrf.mxu0
        %v890 = vadd.f32 0.0, %v889
        %891 = vmatmul.f32.gmra.mxu0 %v571
        %v892 = vpop.f32.mrf.mxu0
        %v893 = vadd.f32 0.0, %v892
        %894 = vmatmul.f32.gmra.mxu0 %v574
        %v895 = vpop.f32.mrf.mxu0
        %v896 = vadd.f32 0.0, %v895
        %897 = vmatmul.f32.gmra.mxu0 %v577
        %v898 = vpop.f32.mrf.mxu0
        %v899 = vadd.f32 0.0, %v898
        %900 = vmatmul.f32.gmra.mxu0 %v580
        %v901 = vpop.f32.mrf.mxu0
        %v902 = vadd.f32 0.0, %v901
        %903 = vmatmul.f32.gmra.mxu0 %v583
        %v904 = vpop.f32.mrf.mxu0
        %v905 = vadd.f32 0.0, %v904
        %906 = vmatmul.f32.gmra.mxu0 %v586
        %v907 = vpop.f32.mrf.mxu0
        %v908 = vadd.f32 0.0, %v907
        %909 = vmatmul.f32.gmra.mxu0 %v589
        %v910 = vpop.f32.mrf.mxu0
        %v911 = vadd.f32 0.0, %v910
        %912 = vmatmul.f32.gmra.mxu0 %v592
        %v913 = vpop.f32.mrf.mxu0
        %v914 = vadd.f32 0.0, %v913
        %915 = vmatmul.f32.gmra.mxu0 %v595
        %v916 = vpop.f32.mrf.mxu0
        %v917 = vadd.f32 0.0, %v916
        %918 = vmatmul.f32.gmra.mxu0 %v598
        %v919 = vpop.f32.mrf.mxu0
        %v920 = vadd.f32 0.0, %v919
        %921 = vmatmul.f32.gmra.mxu0 %v601
        %v922 = vpop.f32.mrf.mxu0
        %v923 = vadd.f32 0.0, %v922
        %924 = vmatmul.f32.gmra.mxu0 %v604
        %v925 = vpop.f32.mrf.mxu0
        %v926 = vadd.f32 0.0, %v925
        %927 = vmatmul.f32.gmra.mxu0 %v607
        %v928 = vpop.f32.mrf.mxu0
        %v929 = vadd.f32 0.0, %v928
        %930 = vmatmul.f32.gmra.mxu0 %v610
        %v931 = vpop.f32.mrf.mxu0
        %v932 = vadd.f32 0.0, %v931
        %933 = vmatmul.f32.gmra.mxu0 %v613
        %v934 = vpop.f32.mrf.mxu0
        %v935 = vadd.f32 0.0, %v934
        %936 = vmatmul.f32.gmra.mxu0 %v616
        %v937 = vpop.f32.mrf.mxu0
        %v938 = vadd.f32 0.0, %v937
        %939 = vmatmul.f32.gmra.mxu0 %v619
        %v940 = vpop.f32.mrf.mxu0
        %v941 = vadd.f32 0.0, %v940
        %942 = vmatmul.f32.gmra.mxu0 %v622
        %v943 = vpop.f32.mrf.mxu0
        %v944 = vadd.f32 0.0, %v943
        %945 = vmatmul.f32.gmra.mxu0 %v625
        %v946 = vpop.f32.mrf.mxu0
        %v947 = vadd.f32 0.0, %v946
        %948 = vmatmul.f32.gmra.mxu0 %v628
        %v949 = vpop.f32.mrf.mxu0
        %v950 = vadd.f32 0.0, %v949
        %951 = vmatmul.f32.gmra.mxu0 %v631
        %v952 = vpop.f32.mrf.mxu0
        %v953 = vadd.f32 0.0, %v952
        %954 = vmatmul.f32.gmra.mxu0 %v634
        %v955 = vpop.f32.mrf.mxu0
        %v956 = vadd.f32 0.0, %v955
        %957 = vmatmul.f32.gmra.mxu0 %v637
        %v958 = vpop.f32.mrf.mxu0
        %v959 = vadd.f32 0.0, %v958
        %960 = vmatmul.f32.gmra.mxu0 %v640
        %v961 = vpop.f32.mrf.mxu0
        %v962 = vadd.f32 0.0, %v961
        %963 = vdwg.mxu0
        %v964 = vld [vmem:[%s396] sm:$0xff]
        %v965 = vld [vmem:[%s396 + $0x8] sm:$0xff]
        %v966 = vld [vmem:[%s396 + $0x10] sm:$0xff]
        %v967 = vld [vmem:[%s396 + $0x18] sm:$0xff]
        %v968 = vld [vmem:[%s396 + $0x20] sm:$0xff]
        %v969 = vld [vmem:[%s396 + $0x28] sm:$0xff]
        %v970 = vld [vmem:[%s396 + $0x30] sm:$0xff]
        %v971 = vld [vmem:[%s396 + $0x38] sm:$0xff]
        %v972 = vld [vmem:[%s396 + $0x40] sm:$0xff]
        %v973 = vld [vmem:[%s396 + $0x48] sm:$0xff]
        %v974 = vld [vmem:[%s396 + $0x50] sm:$0xff]
        %v975 = vld [vmem:[%s396 + $0x58] sm:$0xff]
        %v976 = vld [vmem:[%s396 + $0x60] sm:$0xff]
        %v977 = vld [vmem:[%s396 + $0x68] sm:$0xff]
        %v978 = vld [vmem:[%s396 + $0x70] sm:$0xff]
        %v979 = vld [vmem:[%s396 + $0x78] sm:$0xff]
        %v980 = vld [vmem:[%s396 + $0x80] sm:$0xff]
        %v981 = vld [vmem:[%s396 + $0x88] sm:$0xff]
        %v982 = vld [vmem:[%s396 + $0x90] sm:$0xff]
        %v983 = vld [vmem:[%s396 + $0x98] sm:$0xff]
        %v984 = vld [vmem:[%s396 + $0xa0] sm:$0xff]
        %v985 = vld [vmem:[%s396 + $0xa8] sm:$0xff]
        %v986 = vld [vmem:[%s396 + $0xb0] sm:$0xff]
        %v987 = vld [vmem:[%s396 + $0xb8] sm:$0xff]
        %v988 = vld [vmem:[%s396 + $0xc0] sm:$0xff]
        %v989 = vld [vmem:[%s396 + $0xc8] sm:$0xff]
        %v990 = vld [vmem:[%s396 + $0xd0] sm:$0xff]
        %v991 = vld [vmem:[%s396 + $0xd8] sm:$0xff]
        %v992 = vld [vmem:[%s396 + $0xe0] sm:$0xff]
        %v993 = vld [vmem:[%s396 + $0xe8] sm:$0xff]
        %v994 = vld [vmem:[%s396 + $0xf0] sm:$0xff]
        %v995 = vld [vmem:[%s396 + $0xf8] sm:$0xff]
        %v996 = vld [vmem:[%s405] sm:$0x3]
        %v997 = vstv %s480
        %v998 = vmul.f32 %v997, %v756
        %v999 = vmul.f32 %v997, %v869
        %v1000 = vmul.f32 %v997, %v759
        %v1001 = vmul.f32 %v997, %v872
        %v1002 = vmul.f32 %v997, %v762
        %v1003 = vmul.f32 %v997, %v875
        %v1004 = vmul.f32 %v997, %v765
        %v1005 = vmul.f32 %v997, %v878
        %v1006 = vmul.f32 %v997, %v768
        %v1007 = vmul.f32 %v997, %v881
        %v1008 = vmul.f32 %v997, %v771
        %v1009 = vmul.f32 %v997, %v884
        %v1010 = vmul.f32 %v997, %v774
        %v1011 = vmul.f32 %v997, %v887
        %v1012 = vmul.f32 %v997, %v777
        %v1013 = vmul.f32 %v997, %v890
        %v1014 = vmul.f32 %v997, %v780
        %v1015 = vmul.f32 %v997, %v893
        %v1016 = vmul.f32 %v997, %v783
        %v1017 = vmul.f32 %v997, %v896
        %v1018 = vmul.f32 %v997, %v786
        %v1019 = vmul.f32 %v997, %v899
        %v1020 = vmul.f32 %v997, %v789
        %v1021 = vmul.f32 %v997, %v902
        %v1022 = vmul.f32 %v997, %v792
        %v1023 = vmul.f32 %v997, %v905
        %v1024 = vmul.f32 %v997, %v795
        %v1025 = vmul.f32 %v997, %v908
        %v1026 = vmul.f32 %v997, %v798
        %v1027 = vmul.f32 %v997, %v911
        %v1028 = vmul.f32 %v997, %v801
        %v1029 = vmul.f32 %v997, %v914
        %v1030 = vmul.f32 %v997, %v804
        %v1031 = vmul.f32 %v997, %v917
        %v1032 = vmul.f32 %v997, %v807
        %v1033 = vmul.f32 %v997, %v920
        %v1034 = vmul.f32 %v997, %v810
        %v1035 = vmul.f32 %v997, %v923
        %v1036 = vmul.f32 %v997, %v813
        %v1037 = vmul.f32 %v997, %v926
        %v1038 = vmul.f32 %v997, %v816
        %v1039 = vmul.f32 %v997, %v929
        %v1040 = vmul.f32 %v997, %v819
        %v1041 = vmul.f32 %v997, %v932
        %v1042 = vmul.f32 %v997, %v822
        %v1043 = vmul.f32 %v997, %v935
        %v1044 = vmul.f32 %v997, %v825
        %v1045 = vmul.f32 %v997, %v938
        %v1046 = vmul.f32 %v997, %v828
        %v1047 = vmul.f32 %v997, %v941
        %v1048 = vmul.f32 %v997, %v831
        %v1049 = vmul.f32 %v997, %v944
        %v1050 = vmul.f32 %v997, %v834
        %v1051 = vmul.f32 %v997, %v947
        %v1052 = vmul.f32 %v997, %v837
        %v1053 = vmul.f32 %v997, %v950
        %v1054 = vmul.f32 %v997, %v840
        %v1055 = vmul.f32 %v997, %v953
        %v1056 = vmul.f32 %v997, %v843
        %v1057 = vmul.f32 %v997, %v956
        %v1058 = vmul.f32 %v997, %v846
        %v1059 = vmul.f32 %v997, %v959
        %v1060 = vmul.f32 %v997, %v849
        %v1061 = vmul.f32 %v997, %v962
        %1063 = vset.pattern.permute.xlu0 0
        %1064 = vperm.xlu0 %1063, %v964
        %v1065 = vpop.permute.xlu0 %1064
        %1068 = vset.pattern.permute.xlu0 0
        %1069 = vperm.xlu0 %1068, %v965
        %v1070 = vpop.permute.xlu0 %1069
        %1073 = vset.pattern.permute.xlu0 0
        %1074 = vperm.xlu0 %1073, %v966
        %v1075 = vpop.permute.xlu0 %1074
        %1078 = vset.pattern.permute.xlu0 0
        %1079 = vperm.xlu0 %1078, %v967
        %v1080 = vpop.permute.xlu0 %1079
        %1083 = vset.pattern.permute.xlu0 0
        %1084 = vperm.xlu0 %1083, %v968
        %v1085 = vpop.permute.xlu0 %1084
        %1088 = vset.pattern.permute.xlu0 0
        %1089 = vperm.xlu0 %1088, %v969
        %v1090 = vpop.permute.xlu0 %1089
        %1093 = vset.pattern.permute.xlu0 0
        %1094 = vperm.xlu0 %1093, %v970
        %v1095 = vpop.permute.xlu0 %1094
        %1098 = vset.pattern.permute.xlu0 0
        %1099 = vperm.xlu0 %1098, %v971
        %v1100 = vpop.permute.xlu0 %1099
        %1103 = vset.pattern.permute.xlu0 0
        %1104 = vperm.xlu0 %1103, %v972
        %v1105 = vpop.permute.xlu0 %1104
        %1108 = vset.pattern.permute.xlu0 0
        %1109 = vperm.xlu0 %1108, %v973
        %v1110 = vpop.permute.xlu0 %1109
        %1113 = vset.pattern.permute.xlu0 0
        %1114 = vperm.xlu0 %1113, %v974
        %v1115 = vpop.permute.xlu0 %1114
        %1118 = vset.pattern.permute.xlu0 0
        %1119 = vperm.xlu0 %1118, %v975
        %v1120 = vpop.permute.xlu0 %1119
        %1123 = vset.pattern.permute.xlu0 0
        %1124 = vperm.xlu0 %1123, %v976
        %v1125 = vpop.permute.xlu0 %1124
        %1128 = vset.pattern.permute.xlu0 0
        %1129 = vperm.xlu0 %1128, %v977
        %v1130 = vpop.permute.xlu0 %1129
        %1133 = vset.pattern.permute.xlu0 0
        %1134 = vperm.xlu0 %1133, %v978
        %v1135 = vpop.permute.xlu0 %1134
        %1138 = vset.pattern.permute.xlu0 0
        %1139 = vperm.xlu0 %1138, %v979
        %v1140 = vpop.permute.xlu0 %1139
        %1143 = vset.pattern.permute.xlu0 0
        %1144 = vperm.xlu0 %1143, %v980
        %v1145 = vpop.permute.xlu0 %1144
        %1148 = vset.pattern.permute.xlu0 0
        %1149 = vperm.xlu0 %1148, %v981
        %v1150 = vpop.permute.xlu0 %1149
        %1153 = vset.pattern.permute.xlu0 0
        %1154 = vperm.xlu0 %1153, %v982
        %v1155 = vpop.permute.xlu0 %1154
        %1158 = vset.pattern.permute.xlu0 0
        %1159 = vperm.xlu0 %1158, %v983
        %v1160 = vpop.permute.xlu0 %1159
        %1163 = vset.pattern.permute.xlu0 0
        %1164 = vperm.xlu0 %1163, %v984
        %v1165 = vpop.permute.xlu0 %1164
        %1168 = vset.pattern.permute.xlu0 0
        %1169 = vperm.xlu0 %1168, %v985
        %v1170 = vpop.permute.xlu0 %1169
        %1173 = vset.pattern.permute.xlu0 0
        %1174 = vperm.xlu0 %1173, %v986
        %v1175 = vpop.permute.xlu0 %1174
        %1178 = vset.pattern.permute.xlu0 0
        %1179 = vperm.xlu0 %1178, %v987
        %v1180 = vpop.permute.xlu0 %1179
        %1183 = vset.pattern.permute.xlu0 0
        %1184 = vperm.xlu0 %1183, %v988
        %v1185 = vpop.permute.xlu0 %1184
        %1188 = vset.pattern.permute.xlu0 0
        %1189 = vperm.xlu0 %1188, %v989
        %v1190 = vpop.permute.xlu0 %1189
        %1193 = vset.pattern.permute.xlu0 0
        %1194 = vperm.xlu0 %1193, %v990
        %v1195 = vpop.permute.xlu0 %1194
        %1198 = vset.pattern.permute.xlu0 0
        %1199 = vperm.xlu0 %1198, %v991
        %v1200 = vpop.permute.xlu0 %1199
        %1203 = vset.pattern.permute.xlu0 0
        %1204 = vperm.xlu0 %1203, %v992
        %v1205 = vpop.permute.xlu0 %1204
        %1208 = vset.pattern.permute.xlu0 0
        %1209 = vperm.xlu0 %1208, %v993
        %v1210 = vpop.permute.xlu0 %1209
        %1213 = vset.pattern.permute.xlu0 0
        %1214 = vperm.xlu0 %1213, %v994
        %v1215 = vpop.permute.xlu0 %1214
        %1218 = vset.pattern.permute.xlu0 0
        %1219 = vperm.xlu0 %1218, %v995
        %v1220 = vpop.permute.xlu0 %1219
        %v1222 = vsub.f32 %v998, %v1065
        %v1223 = vsub.f32 %v999, %v1065
        %v1224 = vsub.f32 %v1000, %v1070
        %v1225 = vsub.f32 %v1001, %v1070
        %v1226 = vsub.f32 %v1002, %v1075
        %v1227 = vsub.f32 %v1003, %v1075
        %v1228 = vsub.f32 %v1004, %v1080
        %v1229 = vsub.f32 %v1005, %v1080
        %v1230 = vsub.f32 %v1006, %v1085
        %v1231 = vsub.f32 %v1007, %v1085
        %v1232 = vsub.f32 %v1008, %v1090
        %v1233 = vsub.f32 %v1009, %v1090
        %v1234 = vsub.f32 %v1010, %v1095
        %v1235 = vsub.f32 %v1011, %v1095
        %v1236 = vsub.f32 %v1012, %v1100
        %v1237 = vsub.f32 %v1013, %v1100
        %v1238 = vsub.f32 %v1014, %v1105
        %v1239 = vsub.f32 %v1015, %v1105
        %v1240 = vsub.f32 %v1016, %v1110
        %v1241 = vsub.f32 %v1017, %v1110
        %v1242 = vsub.f32 %v1018, %v1115
        %v1243 = vsub.f32 %v1019, %v1115
        %v1244 = vsub.f32 %v1020, %v1120
        %v1245 = vsub.f32 %v1021, %v1120
        %v1246 = vsub.f32 %v1022, %v1125
        %v1247 = vsub.f32 %v1023, %v1125
        %v1248 = vsub.f32 %v1024, %v1130
        %v1249 = vsub.f32 %v1025, %v1130
        %v1250 = vsub.f32 %v1026, %v1135
        %v1251 = vsub.f32 %v1027, %v1135
        %v1252 = vsub.f32 %v1028, %v1140
        %v1253 = vsub.f32 %v1029, %v1140
        %v1254 = vsub.f32 %v1030, %v1145
        %v1255 = vsub.f32 %v1031, %v1145
        %v1256 = vsub.f32 %v1032, %v1150
        %v1257 = vsub.f32 %v1033, %v1150
        %v1258 = vsub.f32 %v1034, %v1155
        %v1259 = vsub.f32 %v1035, %v1155
        %v1260 = vsub.f32 %v1036, %v1160
        %v1261 = vsub.f32 %v1037, %v1160
        %v1262 = vsub.f32 %v1038, %v1165
        %v1263 = vsub.f32 %v1039, %v1165
        %v1264 = vsub.f32 %v1040, %v1170
        %v1265 = vsub.f32 %v1041, %v1170
        %v1266 = vsub.f32 %v1042, %v1175
        %v1267 = vsub.f32 %v1043, %v1175
        %v1268 = vsub.f32 %v1044, %v1180
        %v1269 = vsub.f32 %v1045, %v1180
        %v1270 = vsub.f32 %v1046, %v1185
        %v1271 = vsub.f32 %v1047, %v1185
        %v1272 = vsub.f32 %v1048, %v1190
        %v1273 = vsub.f32 %v1049, %v1190
        %v1274 = vsub.f32 %v1050, %v1195
        %v1275 = vsub.f32 %v1051, %v1195
        %v1276 = vsub.f32 %v1052, %v1200
        %v1277 = vsub.f32 %v1053, %v1200
        %v1278 = vsub.f32 %v1054, %v1205
        %v1279 = vsub.f32 %v1055, %v1205
        %v1280 = vsub.f32 %v1056, %v1210
        %v1281 = vsub.f32 %v1057, %v1210
        %v1282 = vsub.f32 %v1058, %v1215
        %v1283 = vsub.f32 %v1059, %v1215
        %v1284 = vsub.f32 %v1060, %v1220
        %v1285 = vsub.f32 %v1061, %v1220
        %v1287 = vperm.slane %v996, 0
        %v1288 = vperm.slane %v996, 1
        %v1291 = vsub.f32 %v1222, %v1287
        %v1292 = vsub.f32 %v1223, %v1288
        %v1293 = vsub.f32 %v1224, %v1287
        %v1294 = vsub.f32 %v1225, %v1288
        %v1295 = vsub.f32 %v1226, %v1287
        %v1296 = vsub.f32 %v1227, %v1288
        %v1297 = vsub.f32 %v1228, %v1287
        %v1298 = vsub.f32 %v1229, %v1288
        %v1299 = vsub.f32 %v1230, %v1287
        %v1300 = vsub.f32 %v1231, %v1288
        %v1301 = vsub.f32 %v1232, %v1287
        %v1302 = vsub.f32 %v1233, %v1288
        %v1303 = vsub.f32 %v1234, %v1287
        %v1304 = vsub.f32 %v1235, %v1288
        %v1305 = vsub.f32 %v1236, %v1287
        %v1306 = vsub.f32 %v1237, %v1288
        %v1307 = vsub.f32 %v1238, %v1287
        %v1308 = vsub.f32 %v1239, %v1288
        %v1309 = vsub.f32 %v1240, %v1287
        %v1310 = vsub.f32 %v1241, %v1288
        %v1311 = vsub.f32 %v1242, %v1287
        %v1312 = vsub.f32 %v1243, %v1288
        %v1313 = vsub.f32 %v1244, %v1287
        %v1314 = vsub.f32 %v1245, %v1288
        %v1315 = vsub.f32 %v1246, %v1287
        %v1316 = vsub.f32 %v1247, %v1288
        %v1317 = vsub.f32 %v1248, %v1287
        %v1318 = vsub.f32 %v1249, %v1288
        %v1319 = vsub.f32 %v1250, %v1287
        %v1320 = vsub.f32 %v1251, %v1288
        %v1321 = vsub.f32 %v1252, %v1287
        %v1322 = vsub.f32 %v1253, %v1288
        %v1323 = vsub.f32 %v1254, %v1287
        %v1324 = vsub.f32 %v1255, %v1288
        %v1325 = vsub.f32 %v1256, %v1287
        %v1326 = vsub.f32 %v1257, %v1288
        %v1327 = vsub.f32 %v1258, %v1287
        %v1328 = vsub.f32 %v1259, %v1288
        %v1329 = vsub.f32 %v1260, %v1287
        %v1330 = vsub.f32 %v1261, %v1288
        %v1331 = vsub.f32 %v1262, %v1287
        %v1332 = vsub.f32 %v1263, %v1288
        %v1333 = vsub.f32 %v1264, %v1287
        %v1334 = vsub.f32 %v1265, %v1288
        %v1335 = vsub.f32 %v1266, %v1287
        %v1336 = vsub.f32 %v1267, %v1288
        %v1337 = vsub.f32 %v1268, %v1287
        %v1338 = vsub.f32 %v1269, %v1288
        %v1339 = vsub.f32 %v1270, %v1287
        %v1340 = vsub.f32 %v1271, %v1288
        %v1341 = vsub.f32 %v1272, %v1287
        %v1342 = vsub.f32 %v1273, %v1288
        %v1343 = vsub.f32 %v1274, %v1287
        %v1344 = vsub.f32 %v1275, %v1288
        %v1345 = vsub.f32 %v1276, %v1287
        %v1346 = vsub.f32 %v1277, %v1288
        %v1347 = vsub.f32 %v1278, %v1287
        %v1348 = vsub.f32 %v1279, %v1288
        %v1349 = vsub.f32 %v1280, %v1287
        %v1350 = vsub.f32 %v1281, %v1288
        %v1351 = vsub.f32 %v1282, %v1287
        %v1352 = vsub.f32 %v1283, %v1288
        %v1353 = vsub.f32 %v1284, %v1287
        %v1354 = vsub.f32 %v1285, %v1288
        %v1355 = vmin.f32 %v1291, 0.0
        %v1356 = vmin.f32 %v1292, 0.0
        %v1357 = vmin.f32 %v1293, 0.0
        %v1358 = vmin.f32 %v1294, 0.0
        %v1359 = vmin.f32 %v1295, 0.0
        %v1360 = vmin.f32 %v1296, 0.0
        %v1361 = vmin.f32 %v1297, 0.0
        %v1362 = vmin.f32 %v1298, 0.0
        %v1363 = vmin.f32 %v1299, 0.0
        %v1364 = vmin.f32 %v1300, 0.0
        %v1365 = vmin.f32 %v1301, 0.0
        %v1366 = vmin.f32 %v1302, 0.0
        %v1367 = vmin.f32 %v1303, 0.0
        %v1368 = vmin.f32 %v1304, 0.0
        %v1369 = vmin.f32 %v1305, 0.0
        %v1370 = vmin.f32 %v1306, 0.0
        %v1371 = vmin.f32 %v1307, 0.0
        %v1372 = vmin.f32 %v1308, 0.0
        %v1373 = vmin.f32 %v1309, 0.0
        %v1374 = vmin.f32 %v1310, 0.0
        %v1375 = vmin.f32 %v1311, 0.0
        %v1376 = vmin.f32 %v1312, 0.0
        %v1377 = vmin.f32 %v1313, 0.0
        %v1378 = vmin.f32 %v1314, 0.0
        %v1379 = vmin.f32 %v1315, 0.0
        %v1380 = vmin.f32 %v1316, 0.0
        %v1381 = vmin.f32 %v1317, 0.0
        %v1382 = vmin.f32 %v1318, 0.0
        %v1383 = vmin.f32 %v1319, 0.0
        %v1384 = vmin.f32 %v1320, 0.0
        %v1385 = vmin.f32 %v1321, 0.0
        %v1386 = vmin.f32 %v1322, 0.0
        %v1387 = vmin.f32 %v1323, 0.0
        %v1388 = vmin.f32 %v1324, 0.0
        %v1389 = vmin.f32 %v1325, 0.0
        %v1390 = vmin.f32 %v1326, 0.0
        %v1391 = vmin.f32 %v1327, 0.0
        %v1392 = vmin.f32 %v1328, 0.0
        %v1393 = vmin.f32 %v1329, 0.0
        %v1394 = vmin.f32 %v1330, 0.0
        %v1395 = vmin.f32 %v1331, 0.0
        %v1396 = vmin.f32 %v1332, 0.0
        %v1397 = vmin.f32 %v1333, 0.0
        %v1398 = vmin.f32 %v1334, 0.0
        %v1399 = vmin.f32 %v1335, 0.0
        %v1400 = vmin.f32 %v1336, 0.0
        %v1401 = vmin.f32 %v1337, 0.0
        %v1402 = vmin.f32 %v1338, 0.0
        %v1403 = vmin.f32 %v1339, 0.0
        %v1404 = vmin.f32 %v1340, 0.0
        %v1405 = vmin.f32 %v1341, 0.0
        %v1406 = vmin.f32 %v1342, 0.0
        %v1407 = vmin.f32 %v1343, 0.0
        %v1408 = vmin.f32 %v1344, 0.0
        %v1409 = vmin.f32 %v1345, 0.0
        %v1410 = vmin.f32 %v1346, 0.0
        %v1411 = vmin.f32 %v1347, 0.0
        %v1412 = vmin.f32 %v1348, 0.0
        %v1413 = vmin.f32 %v1349, 0.0
        %v1414 = vmin.f32 %v1350, 0.0
        %v1415 = vmin.f32 %v1351, 0.0
        %v1416 = vmin.f32 %v1352, 0.0
        %v1417 = vmin.f32 %v1353, 0.0
        %v1418 = vmin.f32 %v1354, 0.0
        %v1419 = vld [vmem:[%s367] sm:$0xff]
        %v1420 = vld [vmem:[%s367 + $0x8] sm:$0xff]
        %v1421 = vld [vmem:[%s367 + $0x10] sm:$0xff]
        %v1422 = vld [vmem:[%s367 + $0x18] sm:$0xff]
        %v1423 = vld [vmem:[%s367 + $0x20] sm:$0xff]
        %v1424 = vld [vmem:[%s367 + $0x28] sm:$0xff]
        %v1425 = vld [vmem:[%s367 + $0x30] sm:$0xff]
        %v1426 = vld [vmem:[%s367 + $0x38] sm:$0xff]
        %v1427 = vld [vmem:[%s367 + $0x40] sm:$0xff]
        %v1428 = vld [vmem:[%s367 + $0x48] sm:$0xff]
        %v1429 = vld [vmem:[%s367 + $0x50] sm:$0xff]
        %v1430 = vld [vmem:[%s367 + $0x58] sm:$0xff]
        %v1431 = vld [vmem:[%s367 + $0x60] sm:$0xff]
        %v1432 = vld [vmem:[%s367 + $0x68] sm:$0xff]
        %v1433 = vld [vmem:[%s367 + $0x70] sm:$0xff]
        %v1434 = vld [vmem:[%s367 + $0x78] sm:$0xff]
        %v1435 = vld [vmem:[%s367 + $0x80] sm:$0xff]
        %v1436 = vld [vmem:[%s367 + $0x88] sm:$0xff]
        %v1437 = vld [vmem:[%s367 + $0x90] sm:$0xff]
        %v1438 = vld [vmem:[%s367 + $0x98] sm:$0xff]
        %v1439 = vld [vmem:[%s367 + $0xa0] sm:$0xff]
        %v1440 = vld [vmem:[%s367 + $0xa8] sm:$0xff]
        %v1441 = vld [vmem:[%s367 + $0xb0] sm:$0xff]
        %v1442 = vld [vmem:[%s367 + $0xb8] sm:$0xff]
        %v1443 = vld [vmem:[%s367 + $0xc0] sm:$0xff]
        %v1444 = vld [vmem:[%s367 + $0xc8] sm:$0xff]
        %v1445 = vld [vmem:[%s367 + $0xd0] sm:$0xff]
        %v1446 = vld [vmem:[%s367 + $0xd8] sm:$0xff]
        %v1447 = vld [vmem:[%s367 + $0xe0] sm:$0xff]
        %v1448 = vld [vmem:[%s367 + $0xe8] sm:$0xff]
        %v1449 = vld [vmem:[%s367 + $0xf0] sm:$0xff]
        %v1450 = vld [vmem:[%s367 + $0xf8] sm:$0xff]
        %v1451 = vld [vmem:[%s367 + $0x100] sm:$0xff]
        %v1452 = vld [vmem:[%s367 + $0x108] sm:$0xff]
        %v1453 = vld [vmem:[%s367 + $0x110] sm:$0xff]
        %v1454 = vld [vmem:[%s367 + $0x118] sm:$0xff]
        %v1455 = vld [vmem:[%s367 + $0x120] sm:$0xff]
        %v1456 = vld [vmem:[%s367 + $0x128] sm:$0xff]
        %v1457 = vld [vmem:[%s367 + $0x130] sm:$0xff]
        %v1458 = vld [vmem:[%s367 + $0x138] sm:$0xff]
        %v1459 = vld [vmem:[%s367 + $0x140] sm:$0xff]
        %v1460 = vld [vmem:[%s367 + $0x148] sm:$0xff]
        %v1461 = vld [vmem:[%s367 + $0x150] sm:$0xff]
        %v1462 = vld [vmem:[%s367 + $0x158] sm:$0xff]
        %v1463 = vld [vmem:[%s367 + $0x160] sm:$0xff]
        %v1464 = vld [vmem:[%s367 + $0x168] sm:$0xff]
        %v1465 = vld [vmem:[%s367 + $0x170] sm:$0xff]
        %v1466 = vld [vmem:[%s367 + $0x178] sm:$0xff]
        %v1467 = vld [vmem:[%s367 + $0x180] sm:$0xff]
        %v1468 = vld [vmem:[%s367 + $0x188] sm:$0xff]
        %v1469 = vld [vmem:[%s367 + $0x190] sm:$0xff]
        %v1470 = vld [vmem:[%s367 + $0x198] sm:$0xff]
        %v1471 = vld [vmem:[%s367 + $0x1a0] sm:$0xff]
        %v1472 = vld [vmem:[%s367 + $0x1a8] sm:$0xff]
        %v1473 = vld [vmem:[%s367 + $0x1b0] sm:$0xff]
        %v1474 = vld [vmem:[%s367 + $0x1b8] sm:$0xff]
        %v1475 = vld [vmem:[%s367 + $0x1c0] sm:$0xff]
        %v1476 = vld [vmem:[%s367 + $0x1c8] sm:$0xff]
        %v1477 = vld [vmem:[%s367 + $0x1d0] sm:$0xff]
        %v1478 = vld [vmem:[%s367 + $0x1d8] sm:$0xff]
        %v1479 = vld [vmem:[%s367 + $0x1e0] sm:$0xff]
        %v1480 = vld [vmem:[%s367 + $0x1e8] sm:$0xff]
        %v1481 = vld [vmem:[%s367 + $0x1f0] sm:$0xff]
        %v1482 = vld [vmem:[%s367 + $0x1f8] sm:$0xff]
        %v1483 = vmul.f32 %v1355, 1.442695
        %v1484 = vpow.pop %v1483
        %v1485 = vmul.f32 %v1356, 1.442695
        %v1486 = vpow.pop %v1485
        %v1487 = vmul.f32 %v1357, 1.442695
        %v1488 = vpow.pop %v1487
        %v1489 = vmul.f32 %v1358, 1.442695
        %v1490 = vpow.pop %v1489
        %v1491 = vmul.f32 %v1359, 1.442695
        %v1492 = vpow.pop %v1491
        %v1493 = vmul.f32 %v1360, 1.442695
        %v1494 = vpow.pop %v1493
        %v1495 = vmul.f32 %v1361, 1.442695
        %v1496 = vpow.pop %v1495
        %v1497 = vmul.f32 %v1362, 1.442695
        %v1498 = vpow.pop %v1497
        %v1499 = vmul.f32 %v1363, 1.442695
        %v1500 = vpow.pop %v1499
        %v1501 = vmul.f32 %v1364, 1.442695
        %v1502 = vpow.pop %v1501
        %v1503 = vmul.f32 %v1365, 1.442695
        %v1504 = vpow.pop %v1503
        %v1505 = vmul.f32 %v1366, 1.442695
        %v1506 = vpow.pop %v1505
        %v1507 = vmul.f32 %v1367, 1.442695
        %v1508 = vpow.pop %v1507
        %v1509 = vmul.f32 %v1368, 1.442695
        %v1510 = vpow.pop %v1509
        %v1511 = vmul.f32 %v1369, 1.442695
        %v1512 = vpow.pop %v1511
        %v1513 = vmul.f32 %v1370, 1.442695
        %v1514 = vpow.pop %v1513
        %v1515 = vmul.f32 %v1371, 1.442695
        %v1516 = vpow.pop %v1515
        %v1517 = vmul.f32 %v1372, 1.442695
        %v1518 = vpow.pop %v1517
        %v1519 = vmul.f32 %v1373, 1.442695
        %v1520 = vpow.pop %v1519
        %v1521 = vmul.f32 %v1374, 1.442695
        %v1522 = vpow.pop %v1521
        %v1523 = vmul.f32 %v1375, 1.442695
        %v1524 = vpow.pop %v1523
        %v1525 = vmul.f32 %v1376, 1.442695
        %v1526 = vpow.pop %v1525
        %v1527 = vmul.f32 %v1377, 1.442695
        %v1528 = vpow.pop %v1527
        %v1529 = vmul.f32 %v1378, 1.442695
        %v1530 = vpow.pop %v1529
        %v1531 = vmul.f32 %v1379, 1.442695
        %v1532 = vpow.pop %v1531
        %v1533 = vmul.f32 %v1380, 1.442695
        %v1534 = vpow.pop %v1533
        %v1535 = vmul.f32 %v1381, 1.442695
        %v1536 = vpow.pop %v1535
        %v1537 = vmul.f32 %v1382, 1.442695
        %v1538 = vpow.pop %v1537
        %v1539 = vmul.f32 %v1383, 1.442695
        %v1540 = vpow.pop %v1539
        %v1541 = vmul.f32 %v1384, 1.442695
        %v1542 = vpow.pop %v1541
        %v1543 = vmul.f32 %v1385, 1.442695
        %v1544 = vpow.pop %v1543
        %v1545 = vmul.f32 %v1386, 1.442695
        %v1546 = vpow.pop %v1545
        %v1547 = vmul.f32 %v1387, 1.442695
        %v1548 = vpow.pop %v1547
        %v1549 = vmul.f32 %v1388, 1.442695
        %v1550 = vpow.pop %v1549
        %v1551 = vmul.f32 %v1389, 1.442695
        %v1552 = vpow.pop %v1551
        %v1553 = vmul.f32 %v1390, 1.442695
        %v1554 = vpow.pop %v1553
        %v1555 = vmul.f32 %v1391, 1.442695
        %v1556 = vpow.pop %v1555
        %v1557 = vmul.f32 %v1392, 1.442695
        %v1558 = vpow.pop %v1557
        %v1559 = vmul.f32 %v1393, 1.442695
        %v1560 = vpow.pop %v1559
        %v1561 = vmul.f32 %v1394, 1.442695
        %v1562 = vpow.pop %v1561
        %v1563 = vmul.f32 %v1395, 1.442695
        %v1564 = vpow.pop %v1563
        %v1565 = vmul.f32 %v1396, 1.442695
        %v1566 = vpow.pop %v1565
        %v1567 = vmul.f32 %v1397, 1.442695
        %v1568 = vpow.pop %v1567
        %v1569 = vmul.f32 %v1398, 1.442695
        %v1570 = vpow.pop %v1569
        %v1571 = vmul.f32 %v1399, 1.442695
        %v1572 = vpow.pop %v1571
        %v1573 = vmul.f32 %v1400, 1.442695
        %v1574 = vpow.pop %v1573
        %v1575 = vmul.f32 %v1401, 1.442695
        %v1576 = vpow.pop %v1575
        %v1577 = vmul.f32 %v1402, 1.442695
        %v1578 = vpow.pop %v1577
        %v1579 = vmul.f32 %v1403, 1.442695
        %v1580 = vpow.pop %v1579
        %v1581 = vmul.f32 %v1404, 1.442695
        %v1582 = vpow.pop %v1581
        %v1583 = vmul.f32 %v1405, 1.442695
        %v1584 = vpow.pop %v1583
        %v1585 = vmul.f32 %v1406, 1.442695
        %v1586 = vpow.pop %v1585
        %v1587 = vmul.f32 %v1407, 1.442695
        %v1588 = vpow.pop %v1587
        %v1589 = vmul.f32 %v1408, 1.442695
        %v1590 = vpow.pop %v1589
        %v1591 = vmul.f32 %v1409, 1.442695
        %v1592 = vpow.pop %v1591
        %v1593 = vmul.f32 %v1410, 1.442695
        %v1594 = vpow.pop %v1593
        %v1595 = vmul.f32 %v1411, 1.442695
        %v1596 = vpow.pop %v1595
        %v1597 = vmul.f32 %v1412, 1.442695
        %v1598 = vpow.pop %v1597
        %v1599 = vmul.f32 %v1413, 1.442695
        %v1600 = vpow.pop %v1599
        %v1601 = vmul.f32 %v1414, 1.442695
        %v1602 = vpow.pop %v1601
        %v1603 = vmul.f32 %v1415, 1.442695
        %v1604 = vpow.pop %v1603
        %v1605 = vmul.f32 %v1416, 1.442695
        %v1606 = vpow.pop %v1605
        %v1607 = vmul.f32 %v1417, 1.442695
        %v1608 = vpow.pop %v1607
        %v1609 = vmul.f32 %v1418, 1.442695
        %v1610 = vpow.pop %v1609
        %v1611 = vstv %s478
        %v1612 = vmul.f32 %v1611, %v1484
        %v1613 = vmul.f32 %v1611, %v1486
        %v1614 = vmul.f32 %v1611, %v1488
        %v1615 = vmul.f32 %v1611, %v1490
        %v1616 = vmul.f32 %v1611, %v1492
        %v1617 = vmul.f32 %v1611, %v1494
        %v1618 = vmul.f32 %v1611, %v1496
        %v1619 = vmul.f32 %v1611, %v1498
        %v1620 = vmul.f32 %v1611, %v1500
        %v1621 = vmul.f32 %v1611, %v1502
        %v1622 = vmul.f32 %v1611, %v1504
        %v1623 = vmul.f32 %v1611, %v1506
        %v1624 = vmul.f32 %v1611, %v1508
        %v1625 = vmul.f32 %v1611, %v1510
        %v1626 = vmul.f32 %v1611, %v1512
        %v1627 = vmul.f32 %v1611, %v1514
        %v1628 = vmul.f32 %v1611, %v1516
        %v1629 = vmul.f32 %v1611, %v1518
        %v1630 = vmul.f32 %v1611, %v1520
        %v1631 = vmul.f32 %v1611, %v1522
        %v1632 = vmul.f32 %v1611, %v1524
        %v1633 = vmul.f32 %v1611, %v1526
        %v1634 = vmul.f32 %v1611, %v1528
        %v1635 = vmul.f32 %v1611, %v1530
        %v1636 = vmul.f32 %v1611, %v1532
        %v1637 = vmul.f32 %v1611, %v1534
        %v1638 = vmul.f32 %v1611, %v1536
        %v1639 = vmul.f32 %v1611, %v1538
        %v1640 = vmul.f32 %v1611, %v1540
        %v1641 = vmul.f32 %v1611, %v1542
        %v1642 = vmul.f32 %v1611, %v1544
        %v1643 = vmul.f32 %v1611, %v1546
        %v1644 = vmul.f32 %v1611, %v1548
        %v1645 = vmul.f32 %v1611, %v1550
        %v1646 = vmul.f32 %v1611, %v1552
        %v1647 = vmul.f32 %v1611, %v1554
        %v1648 = vmul.f32 %v1611, %v1556
        %v1649 = vmul.f32 %v1611, %v1558
        %v1650 = vmul.f32 %v1611, %v1560
        %v1651 = vmul.f32 %v1611, %v1562
        %v1652 = vmul.f32 %v1611, %v1564
        %v1653 = vmul.f32 %v1611, %v1566
        %v1654 = vmul.f32 %v1611, %v1568
        %v1655 = vmul.f32 %v1611, %v1570
        %v1656 = vmul.f32 %v1611, %v1572
        %v1657 = vmul.f32 %v1611, %v1574
        %v1658 = vmul.f32 %v1611, %v1576
        %v1659 = vmul.f32 %v1611, %v1578
        %v1660 = vmul.f32 %v1611, %v1580
        %v1661 = vmul.f32 %v1611, %v1582
        %v1662 = vmul.f32 %v1611, %v1584
        %v1663 = vmul.f32 %v1611, %v1586
        %v1664 = vmul.f32 %v1611, %v1588
        %v1665 = vmul.f32 %v1611, %v1590
        %v1666 = vmul.f32 %v1611, %v1592
        %v1667 = vmul.f32 %v1611, %v1594
        %v1668 = vmul.f32 %v1611, %v1596
        %v1669 = vmul.f32 %v1611, %v1598
        %v1670 = vmul.f32 %v1611, %v1600
        %v1671 = vmul.f32 %v1611, %v1602
        %v1672 = vmul.f32 %v1611, %v1604
        %v1673 = vmul.f32 %v1611, %v1606
        %v1674 = vmul.f32 %v1611, %v1608
        %v1675 = vmul.f32 %v1611, %v1610
        %v1676 = vadd.f32 %v1419, %v1612
        %v1677 = vadd.f32 %v1420, %v1613
        %v1678 = vadd.f32 %v1421, %v1614
        %v1679 = vadd.f32 %v1422, %v1615
        %v1680 = vadd.f32 %v1423, %v1616
        %v1681 = vadd.f32 %v1424, %v1617
        %v1682 = vadd.f32 %v1425, %v1618
        %v1683 = vadd.f32 %v1426, %v1619
        %v1684 = vadd.f32 %v1427, %v1620
        %v1685 = vadd.f32 %v1428, %v1621
        %v1686 = vadd.f32 %v1429, %v1622
        %v1687 = vadd.f32 %v1430, %v1623
        %v1688 = vadd.f32 %v1431, %v1624
        %v1689 = vadd.f32 %v1432, %v1625
        %v1690 = vadd.f32 %v1433, %v1626
        %v1691 = vadd.f32 %v1434, %v1627
        %v1692 = vadd.f32 %v1435, %v1628
        %v1693 = vadd.f32 %v1436, %v1629
        %v1694 = vadd.f32 %v1437, %v1630
        %v1695 = vadd.f32 %v1438, %v1631
        %v1696 = vadd.f32 %v1439, %v1632
        %v1697 = vadd.f32 %v1440, %v1633
        %v1698 = vadd.f32 %v1441, %v1634
        %v1699 = vadd.f32 %v1442, %v1635
        %v1700 = vadd.f32 %v1443, %v1636
        %v1701 = vadd.f32 %v1444, %v1637
        %v1702 = vadd.f32 %v1445, %v1638
        %v1703 = vadd.f32 %v1446, %v1639
        %v1704 = vadd.f32 %v1447, %v1640
        %v1705 = vadd.f32 %v1448, %v1641
        %v1706 = vadd.f32 %v1449, %v1642
        %v1707 = vadd.f32 %v1450, %v1643
        %v1708 = vadd.f32 %v1451, %v1644
        %v1709 = vadd.f32 %v1452, %v1645
        %v1710 = vadd.f32 %v1453, %v1646
        %v1711 = vadd.f32 %v1454, %v1647
        %v1712 = vadd.f32 %v1455, %v1648
        %v1713 = vadd.f32 %v1456, %v1649
        %v1714 = vadd.f32 %v1457, %v1650
        %v1715 = vadd.f32 %v1458, %v1651
        %v1716 = vadd.f32 %v1459, %v1652
        %v1717 = vadd.f32 %v1460, %v1653
        %v1718 = vadd.f32 %v1461, %v1654
        %v1719 = vadd.f32 %v1462, %v1655
        %v1720 = vadd.f32 %v1463, %v1656
        %v1721 = vadd.f32 %v1464, %v1657
        %v1722 = vadd.f32 %v1465, %v1658
        %v1723 = vadd.f32 %v1466, %v1659
        %v1724 = vadd.f32 %v1467, %v1660
        %v1725 = vadd.f32 %v1468, %v1661
        %v1726 = vadd.f32 %v1469, %v1662
        %v1727 = vadd.f32 %v1470, %v1663
        %v1728 = vadd.f32 %v1471, %v1664
        %v1729 = vadd.f32 %v1472, %v1665
        %v1730 = vadd.f32 %v1473, %v1666
        %v1731 = vadd.f32 %v1474, %v1667
        %v1732 = vadd.f32 %v1475, %v1668
        %v1733 = vadd.f32 %v1476, %v1669
        %v1734 = vadd.f32 %v1477, %v1670
        %v1735 = vadd.f32 %v1478, %v1671
        %v1736 = vadd.f32 %v1479, %v1672
        %v1737 = vadd.f32 %v1480, %v1673
        %v1738 = vadd.f32 %v1481, %v1674
        %v1739 = vadd.f32 %v1482, %v1675
        %1740 = vst [vmem:[%s367] sm:$0xff] %v1676
        %1741 = vst [vmem:[%s367 + $0x8] sm:$0xff] %v1677
        %1742 = vst [vmem:[%s367 + $0x10] sm:$0xff] %v1678
        %1743 = vst [vmem:[%s367 + $0x18] sm:$0xff] %v1679
        %1744 = vst [vmem:[%s367 + $0x20] sm:$0xff] %v1680
        %1745 = vst [vmem:[%s367 + $0x28] sm:$0xff] %v1681
        %1746 = vst [vmem:[%s367 + $0x30] sm:$0xff] %v1682
        %1747 = vst [vmem:[%s367 + $0x38] sm:$0xff] %v1683
        %1748 = vst [vmem:[%s367 + $0x40] sm:$0xff] %v1684
        %1749 = vst [vmem:[%s367 + $0x48] sm:$0xff] %v1685
        %1750 = vst [vmem:[%s367 + $0x50] sm:$0xff] %v1686
        %1751 = vst [vmem:[%s367 + $0x58] sm:$0xff] %v1687
        %1752 = vst [vmem:[%s367 + $0x60] sm:$0xff] %v1688
        %1753 = vst [vmem:[%s367 + $0x68] sm:$0xff] %v1689
        %1754 = vst [vmem:[%s367 + $0x70] sm:$0xff] %v1690
        %1755 = vst [vmem:[%s367 + $0x78] sm:$0xff] %v1691
        %1756 = vst [vmem:[%s367 + $0x80] sm:$0xff] %v1692
        %1757 = vst [vmem:[%s367 + $0x88] sm:$0xff] %v1693
        %1758 = vst [vmem:[%s367 + $0x90] sm:$0xff] %v1694
        %1759 = vst [vmem:[%s367 + $0x98] sm:$0xff] %v1695
        %1760 = vst [vmem:[%s367 + $0xa0] sm:$0xff] %v1696
        %1761 = vst [vmem:[%s367 + $0xa8] sm:$0xff] %v1697
        %1762 = vst [vmem:[%s367 + $0xb0] sm:$0xff] %v1698
        %1763 = vst [vmem:[%s367 + $0xb8] sm:$0xff] %v1699
        %1764 = vst [vmem:[%s367 + $0xc0] sm:$0xff] %v1700
        %1765 = vst [vmem:[%s367 + $0xc8] sm:$0xff] %v1701
        %1766 = vst [vmem:[%s367 + $0xd0] sm:$0xff] %v1702
        %1767 = vst [vmem:[%s367 + $0xd8] sm:$0xff] %v1703
        %1768 = vst [vmem:[%s367 + $0xe0] sm:$0xff] %v1704
        %1769 = vst [vmem:[%s367 + $0xe8] sm:$0xff] %v1705
        %1770 = vst [vmem:[%s367 + $0xf0] sm:$0xff] %v1706
        %1771 = vst [vmem:[%s367 + $0xf8] sm:$0xff] %v1707
        %1772 = vst [vmem:[%s367 + $0x100] sm:$0xff] %v1708
        %1773 = vst [vmem:[%s367 + $0x108] sm:$0xff] %v1709
        %1774 = vst [vmem:[%s367 + $0x110] sm:$0xff] %v1710
        %1775 = vst [vmem:[%s367 + $0x118] sm:$0xff] %v1711
        %1776 = vst [vmem:[%s367 + $0x120] sm:$0xff] %v1712
        %1777 = vst [vmem:[%s367 + $0x128] sm:$0xff] %v1713
        %1778 = vst [vmem:[%s367 + $0x130] sm:$0xff] %v1714
        %1779 = vst [vmem:[%s367 + $0x138] sm:$0xff] %v1715
        %1780 = vst [vmem:[%s367 + $0x140] sm:$0xff] %v1716
        %1781 = vst [vmem:[%s367 + $0x148] sm:$0xff] %v1717
        %1782 = vst [vmem:[%s367 + $0x150] sm:$0xff] %v1718
        %1783 = vst [vmem:[%s367 + $0x158] sm:$0xff] %v1719
        %1784 = vst [vmem:[%s367 + $0x160] sm:$0xff] %v1720
        %1785 = vst [vmem:[%s367 + $0x168] sm:$0xff] %v1721
        %1786 = vst [vmem:[%s367 + $0x170] sm:$0xff] %v1722
        %1787 = vst [vmem:[%s367 + $0x178] sm:$0xff] %v1723
        %1788 = vst [vmem:[%s367 + $0x180] sm:$0xff] %v1724
        %1789 = vst [vmem:[%s367 + $0x188] sm:$0xff] %v1725
        %1790 = vst [vmem:[%s367 + $0x190] sm:$0xff] %v1726
        %1791 = vst [vmem:[%s367 + $0x198] sm:$0xff] %v1727
        %1792 = vst [vmem:[%s367 + $0x1a0] sm:$0xff] %v1728
        %1793 = vst [vmem:[%s367 + $0x1a8] sm:$0xff] %v1729
        %1794 = vst [vmem:[%s367 + $0x1b0] sm:$0xff] %v1730
        %1795 = vst [vmem:[%s367 + $0x1b8] sm:$0xff] %v1731
        %1796 = vst [vmem:[%s367 + $0x1c0] sm:$0xff] %v1732
        %1797 = vst [vmem:[%s367 + $0x1c8] sm:$0xff] %v1733
        %1798 = vst [vmem:[%s367 + $0x1d0] sm:$0xff] %v1734
        %1799 = vst [vmem:[%s367 + $0x1d8] sm:$0xff] %v1735
        %1800 = vst [vmem:[%s367 + $0x1e0] sm:$0xff] %v1736
        %1801 = vst [vmem:[%s367 + $0x1e8] sm:$0xff] %v1737
        %1802 = vst [vmem:[%s367 + $0x1f0] sm:$0xff] %v1738
        %1803 = vst [vmem:[%s367 + $0x1f8] sm:$0xff] %v1739
        %p1804 = scmp.eq.s32.totalorder %s29, 1
        %p1805 = scmp.eq.s32.totalorder %s27, %s28
        %p1806 = pnand %p1804, %p1805
        %p1807 = pneg %p1806
        // Predicated region
        $region53: #{tpu_custom_call.1} parent=43 // pred_check
          _
        $region54: #{tpu_custom_call.1} parent=43 // pred_check_branch
          %1809 = sbr.rel (%p1806) target = $region56
        $region55: #{tpu_custom_call.1} parent=43 // pred_region
          %s1810 = smul.u32 %s27, 256
          %v1811 = vlaneseq
          %v1812 = vshrl.u32 %v1811, 7
          %v1813 = vadd.s32 %v1812, 8
          %v1814 = vadd.s32 %v1812, 16
          %v1815 = vadd.s32 %v1812, 24
          %v1816 = vadd.s32 %v1812, 32
          %v1817 = vadd.s32 %v1812, 40
          %v1818 = vadd.s32 %v1812, 48
          %v1819 = vadd.s32 %v1812, 56
          %v1820 = vadd.s32 %v1812, 64
          %v1821 = vadd.s32 %v1812, 72
          %v1822 = vadd.s32 %v1812, 80
          %v1823 = vadd.s32 %v1812, 88
          %v1824 = vadd.s32 %v1812, 96
          %v1825 = vadd.s32 %v1812, 104
          %v1826 = vadd.s32 %v1812, 112
          %v1827 = vadd.s32 %v1812, 120
          %v1828 = vadd.s32 %v1812, 128
          %v1829 = vadd.s32 %v1812, 136
          %v1830 = vadd.s32 %v1812, 144
          %v1831 = vadd.s32 %v1812, 152
          %v1832 = vadd.s32 %v1812, 160
          %v1833 = vadd.s32 %v1812, 168
          %v1834 = vadd.s32 %v1812, 176
          %v1835 = vadd.s32 %v1812, 184
          %v1836 = vadd.s32 %v1812, 192
          %v1837 = vadd.s32 %v1812, 200
          %v1838 = vadd.s32 %v1812, 208
          %v1839 = vadd.s32 %v1812, 216
          %v1840 = vadd.s32 %v1812, 224
          %v1841 = vadd.s32 %v1812, 232
          %v1842 = vadd.s32 %v1812, 240
          %v1843 = vadd.s32 %v1812, 248
          %v1844 = vstv %s1810
          %v1845 = vadd.s32 %v1844, %v1812
          %v1846 = vadd.s32 %v1844, %v1813
          %v1847 = vadd.s32 %v1844, %v1814
          %v1848 = vadd.s32 %v1844, %v1815
          %v1849 = vadd.s32 %v1844, %v1816
          %v1850 = vadd.s32 %v1844, %v1817
          %v1851 = vadd.s32 %v1844, %v1818
          %v1852 = vadd.s32 %v1844, %v1819
          %v1853 = vadd.s32 %v1844, %v1820
          %v1854 = vadd.s32 %v1844, %v1821
          %v1855 = vadd.s32 %v1844, %v1822
          %v1856 = vadd.s32 %v1844, %v1823
          %v1857 = vadd.s32 %v1844, %v1824
          %v1858 = vadd.s32 %v1844, %v1825
          %v1859 = vadd.s32 %v1844, %v1826
          %v1860 = vadd.s32 %v1844, %v1827
          %v1861 = vadd.s32 %v1844, %v1828
          %v1862 = vadd.s32 %v1844, %v1829
          %v1863 = vadd.s32 %v1844, %v1830
          %v1864 = vadd.s32 %v1844, %v1831
          %v1865 = vadd.s32 %v1844, %v1832
          %v1866 = vadd.s32 %v1844, %v1833
          %v1867 = vadd.s32 %v1844, %v1834
          %v1868 = vadd.s32 %v1844, %v1835
          %v1869 = vadd.s32 %v1844, %v1836
          %v1870 = vadd.s32 %v1844, %v1837
          %v1871 = vadd.s32 %v1844, %v1838
          %v1872 = vadd.s32 %v1844, %v1839
          %v1873 = vadd.s32 %v1844, %v1840
          %v1874 = vadd.s32 %v1844, %v1841
          %v1875 = vadd.s32 %v1844, %v1842
          %v1876 = vadd.s32 %v1844, %v1843
          %s1877 = smul.u32 %s28, 256
          %v1878 = vlaneseq
          %v1879 = vand.u32 %v1878, 127
          %v1880 = vadd.s32 %v1879, 128
          %v1881 = vstv %s1877
          %v1882 = vadd.s32 %v1881, %v1879
          %v1883 = vadd.s32 %v1881, %v1880
          %v1884 = vld [vmem:[%s367] sm:$0xff]
          %v1885 = vld [vmem:[%s367 + $0x8] sm:$0xff]
          %v1886 = vld [vmem:[%s367 + $0x10] sm:$0xff]
          %v1887 = vld [vmem:[%s367 + $0x18] sm:$0xff]
          %v1888 = vld [vmem:[%s367 + $0x20] sm:$0xff]
          %v1889 = vld [vmem:[%s367 + $0x28] sm:$0xff]
          %v1890 = vld [vmem:[%s367 + $0x30] sm:$0xff]
          %v1891 = vld [vmem:[%s367 + $0x38] sm:$0xff]
          %v1892 = vld [vmem:[%s367 + $0x40] sm:$0xff]
          %v1893 = vld [vmem:[%s367 + $0x48] sm:$0xff]
          %v1894 = vld [vmem:[%s367 + $0x50] sm:$0xff]
          %v1895 = vld [vmem:[%s367 + $0x58] sm:$0xff]
          %v1896 = vld [vmem:[%s367 + $0x60] sm:$0xff]
          %v1897 = vld [vmem:[%s367 + $0x68] sm:$0xff]
          %v1898 = vld [vmem:[%s367 + $0x70] sm:$0xff]
          %v1899 = vld [vmem:[%s367 + $0x78] sm:$0xff]
          %v1900 = vld [vmem:[%s367 + $0x80] sm:$0xff]
          %v1901 = vld [vmem:[%s367 + $0x88] sm:$0xff]
          %v1902 = vld [vmem:[%s367 + $0x90] sm:$0xff]
          %v1903 = vld [vmem:[%s367 + $0x98] sm:$0xff]
          %v1904 = vld [vmem:[%s367 + $0xa0] sm:$0xff]
          %v1905 = vld [vmem:[%s367 + $0xa8] sm:$0xff]
          %v1906 = vld [vmem:[%s367 + $0xb0] sm:$0xff]
          %v1907 = vld [vmem:[%s367 + $0xb8] sm:$0xff]
          %v1908 = vld [vmem:[%s367 + $0xc0] sm:$0xff]
          %v1909 = vld [vmem:[%s367 + $0xc8] sm:$0xff]
          %v1910 = vld [vmem:[%s367 + $0xd0] sm:$0xff]
          %v1911 = vld [vmem:[%s367 + $0xd8] sm:$0xff]
          %v1912 = vld [vmem:[%s367 + $0xe0] sm:$0xff]
          %v1913 = vld [vmem:[%s367 + $0xe8] sm:$0xff]
          %v1914 = vld [vmem:[%s367 + $0xf0] sm:$0xff]
          %v1915 = vld [vmem:[%s367 + $0xf8] sm:$0xff]
          %v1916 = vld [vmem:[%s367 + $0x100] sm:$0xff]
          %v1917 = vld [vmem:[%s367 + $0x108] sm:$0xff]
          %v1918 = vld [vmem:[%s367 + $0x110] sm:$0xff]
          %v1919 = vld [vmem:[%s367 + $0x118] sm:$0xff]
          %v1920 = vld [vmem:[%s367 + $0x120] sm:$0xff]
          %v1921 = vld [vmem:[%s367 + $0x128] sm:$0xff]
          %v1922 = vld [vmem:[%s367 + $0x130] sm:$0xff]
          %v1923 = vld [vmem:[%s367 + $0x138] sm:$0xff]
          %v1924 = vld [vmem:[%s367 + $0x140] sm:$0xff]
          %v1925 = vld [vmem:[%s367 + $0x148] sm:$0xff]
          %v1926 = vld [vmem:[%s367 + $0x150] sm:$0xff]
          %v1927 = vld [vmem:[%s367 + $0x158] sm:$0xff]
          %v1928 = vld [vmem:[%s367 + $0x160] sm:$0xff]
          %v1929 = vld [vmem:[%s367 + $0x168] sm:$0xff]
          %v1930 = vld [vmem:[%s367 + $0x170] sm:$0xff]
          %v1931 = vld [vmem:[%s367 + $0x178] sm:$0xff]
          %v1932 = vld [vmem:[%s367 + $0x180] sm:$0xff]
          %v1933 = vld [vmem:[%s367 + $0x188] sm:$0xff]
          %v1934 = vld [vmem:[%s367 + $0x190] sm:$0xff]
          %v1935 = vld [vmem:[%s367 + $0x198] sm:$0xff]
          %v1936 = vld [vmem:[%s367 + $0x1a0] sm:$0xff]
          %v1937 = vld [vmem:[%s367 + $0x1a8] sm:$0xff]
          %v1938 = vld [vmem:[%s367 + $0x1b0] sm:$0xff]
          %v1939 = vld [vmem:[%s367 + $0x1b8] sm:$0xff]
          %v1940 = vld [vmem:[%s367 + $0x1c0] sm:$0xff]
          %v1941 = vld [vmem:[%s367 + $0x1c8] sm:$0xff]
          %v1942 = vld [vmem:[%s367 + $0x1d0] sm:$0xff]
          %v1943 = vld [vmem:[%s367 + $0x1d8] sm:$0xff]
          %v1944 = vld [vmem:[%s367 + $0x1e0] sm:$0xff]
          %v1945 = vld [vmem:[%s367 + $0x1e8] sm:$0xff]
          %v1946 = vld [vmem:[%s367 + $0x1f0] sm:$0xff]
          %v1947 = vld [vmem:[%s367 + $0x1f8] sm:$0xff]
          %vm1948 = vcmp.eq.s32.totalorder %v1845, %v1882
          %vm1949 = vcmp.eq.s32.totalorder %v1845, %v1883
          %vm1950 = vcmp.eq.s32.totalorder %v1846, %v1882
          %vm1951 = vcmp.eq.s32.totalorder %v1846, %v1883
          %vm1952 = vcmp.eq.s32.totalorder %v1847, %v1882
          %vm1953 = vcmp.eq.s32.totalorder %v1847, %v1883
          %vm1954 = vcmp.eq.s32.totalorder %v1848, %v1882
          %vm1955 = vcmp.eq.s32.totalorder %v1848, %v1883
          %vm1956 = vcmp.eq.s32.totalorder %v1849, %v1882
          %vm1957 = vcmp.eq.s32.totalorder %v1849, %v1883
          %vm1958 = vcmp.eq.s32.totalorder %v1850, %v1882
          %vm1959 = vcmp.eq.s32.totalorder %v1850, %v1883
          %vm1960 = vcmp.eq.s32.totalorder %v1851, %v1882
          %vm1961 = vcmp.eq.s32.totalorder %v1851, %v1883
          %vm1962 = vcmp.eq.s32.totalorder %v1852, %v1882
          %vm1963 = vcmp.eq.s32.totalorder %v1852, %v1883
          %vm1964 = vcmp.eq.s32.totalorder %v1853, %v1882
          %vm1965 = vcmp.eq.s32.totalorder %v1853, %v1883
          %vm1966 = vcmp.eq.s32.totalorder %v1854, %v1882
          %vm1967 = vcmp.eq.s32.totalorder %v1854, %v1883
          %vm1968 = vcmp.eq.s32.totalorder %v1855, %v1882
          %vm1969 = vcmp.eq.s32.totalorder %v1855, %v1883
          %vm1970 = vcmp.eq.s32.totalorder %v1856, %v1882
          %vm1971 = vcmp.eq.s32.totalorder %v1856, %v1883
          %vm1972 = vcmp.eq.s32.totalorder %v1857, %v1882
          %vm1973 = vcmp.eq.s32.totalorder %v1857, %v1883
          %vm1974 = vcmp.eq.s32.totalorder %v1858, %v1882
          %vm1975 = vcmp.eq.s32.totalorder %v1858, %v1883
          %vm1976 = vcmp.eq.s32.totalorder %v1859, %v1882
          %vm1977 = vcmp.eq.s32.totalorder %v1859, %v1883
          %vm1978 = vcmp.eq.s32.totalorder %v1860, %v1882
          %vm1979 = vcmp.eq.s32.totalorder %v1860, %v1883
          %vm1980 = vcmp.eq.s32.totalorder %v1861, %v1882
          %vm1981 = vcmp.eq.s32.totalorder %v1861, %v1883
          %vm1982 = vcmp.eq.s32.totalorder %v1862, %v1882
          %vm1983 = vcmp.eq.s32.totalorder %v1862, %v1883
          %vm1984 = vcmp.eq.s32.totalorder %v1863, %v1882
          %vm1985 = vcmp.eq.s32.totalorder %v1863, %v1883
          %vm1986 = vcmp.eq.s32.totalorder %v1864, %v1882
          %vm1987 = vcmp.eq.s32.totalorder %v1864, %v1883
          %vm1988 = vcmp.eq.s32.totalorder %v1865, %v1882
          %vm1989 = vcmp.eq.s32.totalorder %v1865, %v1883
          %vm1990 = vcmp.eq.s32.totalorder %v1866, %v1882
          %vm1991 = vcmp.eq.s32.totalorder %v1866, %v1883
          %vm1992 = vcmp.eq.s32.totalorder %v1867, %v1882
          %vm1993 = vcmp.eq.s32.totalorder %v1867, %v1883
          %vm1994 = vcmp.eq.s32.totalorder %v1868, %v1882
          %vm1995 = vcmp.eq.s32.totalorder %v1868, %v1883
          %vm1996 = vcmp.eq.s32.totalorder %v1869, %v1882
          %vm1997 = vcmp.eq.s32.totalorder %v1869, %v1883
          %vm1998 = vcmp.eq.s32.totalorder %v1870, %v1882
          %vm1999 = vcmp.eq.s32.totalorder %v1870, %v1883
          %vm2000 = vcmp.eq.s32.totalorder %v1871, %v1882
          %vm2001 = vcmp.eq.s32.totalorder %v1871, %v1883
          %vm2002 = vcmp.eq.s32.totalorder %v1872, %v1882
          %vm2003 = vcmp.eq.s32.totalorder %v1872, %v1883
          %vm2004 = vcmp.eq.s32.totalorder %v1873, %v1882
          %vm2005 = vcmp.eq.s32.totalorder %v1873, %v1883
          %vm2006 = vcmp.eq.s32.totalorder %v1874, %v1882
          %vm2007 = vcmp.eq.s32.totalorder %v1874, %v1883
          %vm2008 = vcmp.eq.s32.totalorder %v1875, %v1882
          %vm2009 = vcmp.eq.s32.totalorder %v1875, %v1883
          %vm2010 = vcmp.eq.s32.totalorder %v1876, %v1882
          %vm2011 = vcmp.eq.s32.totalorder %v1876, %v1883
          %s2012 = sld [smem:[#allocation2]]
          %v2013 = vstv %s2012
          %v2014 = vsel %vm1948, %v2013, 0.0
          %v2015 = vsel %vm1949, %v2013, 0.0
          %v2016 = vsel %vm1950, %v2013, 0.0
          %v2017 = vsel %vm1951, %v2013, 0.0
          %v2018 = vsel %vm1952, %v2013, 0.0
          %v2019 = vsel %vm1953, %v2013, 0.0
          %v2020 = vsel %vm1954, %v2013, 0.0
          %v2021 = vsel %vm1955, %v2013, 0.0
          %v2022 = vsel %vm1956, %v2013, 0.0
          %v2023 = vsel %vm1957, %v2013, 0.0
          %v2024 = vsel %vm1958, %v2013, 0.0
          %v2025 = vsel %vm1959, %v2013, 0.0
          %v2026 = vsel %vm1960, %v2013, 0.0
          %v2027 = vsel %vm1961, %v2013, 0.0
          %v2028 = vsel %vm1962, %v2013, 0.0
          %v2029 = vsel %vm1963, %v2013, 0.0
          %v2030 = vsel %vm1964, %v2013, 0.0
          %v2031 = vsel %vm1965, %v2013, 0.0
          %v2032 = vsel %vm1966, %v2013, 0.0
          %v2033 = vsel %vm1967, %v2013, 0.0
          %v2034 = vsel %vm1968, %v2013, 0.0
          %v2035 = vsel %vm1969, %v2013, 0.0
          %v2036 = vsel %vm1970, %v2013, 0.0
          %v2037 = vsel %vm1971, %v2013, 0.0
          %v2038 = vsel %vm1972, %v2013, 0.0
          %v2039 = vsel %vm1973, %v2013, 0.0
          %v2040 = vsel %vm1974, %v2013, 0.0
          %v2041 = vsel %vm1975, %v2013, 0.0
          %v2042 = vsel %vm1976, %v2013, 0.0
          %v2043 = vsel %vm1977, %v2013, 0.0
          %v2044 = vsel %vm1978, %v2013, 0.0
          %v2045 = vsel %vm1979, %v2013, 0.0
          %v2046 = vsel %vm1980, %v2013, 0.0
          %v2047 = vsel %vm1981, %v2013, 0.0
          %v2048 = vsel %vm1982, %v2013, 0.0
          %v2049 = vsel %vm1983, %v2013, 0.0
          %v2050 = vsel %vm1984, %v2013, 0.0
          %v2051 = vsel %vm1985, %v2013, 0.0
          %v2052 = vsel %vm1986, %v2013, 0.0
          %v2053 = vsel %vm1987, %v2013, 0.0
          %v2054 = vsel %vm1988, %v2013, 0.0
          %v2055 = vsel %vm1989, %v2013, 0.0
          %v2056 = vsel %vm1990, %v2013, 0.0
          %v2057 = vsel %vm1991, %v2013, 0.0
          %v2058 = vsel %vm1992, %v2013, 0.0
          %v2059 = vsel %vm1993, %v2013, 0.0
          %v2060 = vsel %vm1994, %v2013, 0.0
          %v2061 = vsel %vm1995, %v2013, 0.0
          %v2062 = vsel %vm1996, %v2013, 0.0
          %v2063 = vsel %vm1997, %v2013, 0.0
          %v2064 = vsel %vm1998, %v2013, 0.0
          %v2065 = vsel %vm1999, %v2013, 0.0
          %v2066 = vsel %vm2000, %v2013, 0.0
          %v2067 = vsel %vm2001, %v2013, 0.0
          %v2068 = vsel %vm2002, %v2013, 0.0
          %v2069 = vsel %vm2003, %v2013, 0.0
          %v2070 = vsel %vm2004, %v2013, 0.0
          %v2071 = vsel %vm2005, %v2013, 0.0
          %v2072 = vsel %vm2006, %v2013, 0.0
          %v2073 = vsel %vm2007, %v2013, 0.0
          %v2074 = vsel %vm2008, %v2013, 0.0
          %v2075 = vsel %vm2009, %v2013, 0.0
          %v2076 = vsel %vm2010, %v2013, 0.0
          %v2077 = vsel %vm2011, %v2013, 0.0
          %v2078 = vadd.f32 %v1884, %v2014
          %v2079 = vadd.f32 %v1885, %v2015
          %v2080 = vadd.f32 %v1886, %v2016
          %v2081 = vadd.f32 %v1887, %v2017
          %v2082 = vadd.f32 %v1888, %v2018
          %v2083 = vadd.f32 %v1889, %v2019
          %v2084 = vadd.f32 %v1890, %v2020
          %v2085 = vadd.f32 %v1891, %v2021
          %v2086 = vadd.f32 %v1892, %v2022
          %v2087 = vadd.f32 %v1893, %v2023
          %v2088 = vadd.f32 %v1894, %v2024
          %v2089 = vadd.f32 %v1895, %v2025
          %v2090 = vadd.f32 %v1896, %v2026
          %v2091 = vadd.f32 %v1897, %v2027
          %v2092 = vadd.f32 %v1898, %v2028
          %v2093 = vadd.f32 %v1899, %v2029
          %v2094 = vadd.f32 %v1900, %v2030
          %v2095 = vadd.f32 %v1901, %v2031
          %v2096 = vadd.f32 %v1902, %v2032
          %v2097 = vadd.f32 %v1903, %v2033
          %v2098 = vadd.f32 %v1904, %v2034
          %v2099 = vadd.f32 %v1905, %v2035
          %v2100 = vadd.f32 %v1906, %v2036
          %v2101 = vadd.f32 %v1907, %v2037
          %v2102 = vadd.f32 %v1908, %v2038
          %v2103 = vadd.f32 %v1909, %v2039
          %v2104 = vadd.f32 %v1910, %v2040
          %v2105 = vadd.f32 %v1911, %v2041
          %v2106 = vadd.f32 %v1912, %v2042
          %v2107 = vadd.f32 %v1913, %v2043
          %v2108 = vadd.f32 %v1914, %v2044
          %v2109 = vadd.f32 %v1915, %v2045
          %v2110 = vadd.f32 %v1916, %v2046
          %v2111 = vadd.f32 %v1917, %v2047
          %v2112 = vadd.f32 %v1918, %v2048
          %v2113 = vadd.f32 %v1919, %v2049
          %v2114 = vadd.f32 %v1920, %v2050
          %v2115 = vadd.f32 %v1921, %v2051
          %v2116 = vadd.f32 %v1922, %v2052
          %v2117 = vadd.f32 %v1923, %v2053
          %v2118 = vadd.f32 %v1924, %v2054
          %v2119 = vadd.f32 %v1925, %v2055
          %v2120 = vadd.f32 %v1926, %v2056
          %v2121 = vadd.f32 %v1927, %v2057
          %v2122 = vadd.f32 %v1928, %v2058
          %v2123 = vadd.f32 %v1929, %v2059
          %v2124 = vadd.f32 %v1930, %v2060
          %v2125 = vadd.f32 %v1931, %v2061
          %v2126 = vadd.f32 %v1932, %v2062
          %v2127 = vadd.f32 %v1933, %v2063
          %v2128 = vadd.f32 %v1934, %v2064
          %v2129 = vadd.f32 %v1935, %v2065
          %v2130 = vadd.f32 %v1936, %v2066
          %v2131 = vadd.f32 %v1937, %v2067
          %v2132 = vadd.f32 %v1938, %v2068
          %v2133 = vadd.f32 %v1939, %v2069
          %v2134 = vadd.f32 %v1940, %v2070
          %v2135 = vadd.f32 %v1941, %v2071
          %v2136 = vadd.f32 %v1942, %v2072
          %v2137 = vadd.f32 %v1943, %v2073
          %v2138 = vadd.f32 %v1944, %v2074
          %v2139 = vadd.f32 %v1945, %v2075
          %v2140 = vadd.f32 %v1946, %v2076
          %v2141 = vadd.f32 %v1947, %v2077
          %2142 = vst [vmem:[%s367] sm:$0xff] %v2078
          %2143 = vst [vmem:[%s367 + $0x8] sm:$0xff] %v2079
          %2144 = vst [vmem:[%s367 + $0x10] sm:$0xff] %v2080
          %2145 = vst [vmem:[%s367 + $0x18] sm:$0xff] %v2081
          %2146 = vst [vmem:[%s367 + $0x20] sm:$0xff] %v2082
          %2147 = vst [vmem:[%s367 + $0x28] sm:$0xff] %v2083
          %2148 = vst [vmem:[%s367 + $0x30] sm:$0xff] %v2084
          %2149 = vst [vmem:[%s367 + $0x38] sm:$0xff] %v2085
          %2150 = vst [vmem:[%s367 + $0x40] sm:$0xff] %v2086
          %2151 = vst [vmem:[%s367 + $0x48] sm:$0xff] %v2087
          %2152 = vst [vmem:[%s367 + $0x50] sm:$0xff] %v2088
          %2153 = vst [vmem:[%s367 + $0x58] sm:$0xff] %v2089
          %2154 = vst [vmem:[%s367 + $0x60] sm:$0xff] %v2090
          %2155 = vst [vmem:[%s367 + $0x68] sm:$0xff] %v2091
          %2156 = vst [vmem:[%s367 + $0x70] sm:$0xff] %v2092
          %2157 = vst [vmem:[%s367 + $0x78] sm:$0xff] %v2093
          %2158 = vst [vmem:[%s367 + $0x80] sm:$0xff] %v2094
          %2159 = vst [vmem:[%s367 + $0x88] sm:$0xff] %v2095
          %2160 = vst [vmem:[%s367 + $0x90] sm:$0xff] %v2096
          %2161 = vst [vmem:[%s367 + $0x98] sm:$0xff] %v2097
          %2162 = vst [vmem:[%s367 + $0xa0] sm:$0xff] %v2098
          %2163 = vst [vmem:[%s367 + $0xa8] sm:$0xff] %v2099
          %2164 = vst [vmem:[%s367 + $0xb0] sm:$0xff] %v2100
          %2165 = vst [vmem:[%s367 + $0xb8] sm:$0xff] %v2101
          %2166 = vst [vmem:[%s367 + $0xc0] sm:$0xff] %v2102
          %2167 = vst [vmem:[%s367 + $0xc8] sm:$0xff] %v2103
          %2168 = vst [vmem:[%s367 + $0xd0] sm:$0xff] %v2104
          %2169 = vst [vmem:[%s367 + $0xd8] sm:$0xff] %v2105
          %2170 = vst [vmem:[%s367 + $0xe0] sm:$0xff] %v2106
          %2171 = vst [vmem:[%s367 + $0xe8] sm:$0xff] %v2107
          %2172 = vst [vmem:[%s367 + $0xf0] sm:$0xff] %v2108
          %2173 = vst [vmem:[%s367 + $0xf8] sm:$0xff] %v2109
          %2174 = vst [vmem:[%s367 + $0x100] sm:$0xff] %v2110
          %2175 = vst [vmem:[%s367 + $0x108] sm:$0xff] %v2111
          %2176 = vst [vmem:[%s367 + $0x110] sm:$0xff] %v2112
          %2177 = vst [vmem:[%s367 + $0x118] sm:$0xff] %v2113
          %2178 = vst [vmem:[%s367 + $0x120] sm:$0xff] %v2114
          %2179 = vst [vmem:[%s367 + $0x128] sm:$0xff] %v2115
          %2180 = vst [vmem:[%s367 + $0x130] sm:$0xff] %v2116
          %2181 = vst [vmem:[%s367 + $0x138] sm:$0xff] %v2117
          %2182 = vst [vmem:[%s367 + $0x140] sm:$0xff] %v2118
          %2183 = vst [vmem:[%s367 + $0x148] sm:$0xff] %v2119
          %2184 = vst [vmem:[%s367 + $0x150] sm:$0xff] %v2120
          %2185 = vst [vmem:[%s367 + $0x158] sm:$0xff] %v2121
          %2186 = vst [vmem:[%s367 + $0x160] sm:$0xff] %v2122
          %2187 = vst [vmem:[%s367 + $0x168] sm:$0xff] %v2123
          %2188 = vst [vmem:[%s367 + $0x170] sm:$0xff] %v2124
          %2189 = vst [vmem:[%s367 + $0x178] sm:$0xff] %v2125
          %2190 = vst [vmem:[%s367 + $0x180] sm:$0xff] %v2126
          %2191 = vst [vmem:[%s367 + $0x188] sm:$0xff] %v2127
          %2192 = vst [vmem:[%s367 + $0x190] sm:$0xff] %v2128
          %2193 = vst [vmem:[%s367 + $0x198] sm:$0xff] %v2129
          %2194 = vst [vmem:[%s367 + $0x1a0] sm:$0xff] %v2130
          %2195 = vst [vmem:[%s367 + $0x1a8] sm:$0xff] %v2131
          %2196 = vst [vmem:[%s367 + $0x1b0] sm:$0xff] %v2132
          %2197 = vst [vmem:[%s367 + $0x1b8] sm:$0xff] %v2133
          %2198 = vst [vmem:[%s367 + $0x1c0] sm:$0xff] %v2134
          %2199 = vst [vmem:[%s367 + $0x1c8] sm:$0xff] %v2135
          %2200 = vst [vmem:[%s367 + $0x1d0] sm:$0xff] %v2136
          %2201 = vst [vmem:[%s367 + $0x1d8] sm:$0xff] %v2137
          %2202 = vst [vmem:[%s367 + $0x1e0] sm:$0xff] %v2138
          %2203 = vst [vmem:[%s367 + $0x1e8] sm:$0xff] %v2139
          %2204 = vst [vmem:[%s367 + $0x1f0] sm:$0xff] %v2140
          %2205 = vst [vmem:[%s367 + $0x1f8] sm:$0xff] %v2141
        $region56: #{tpu_custom_call.1} parent=43 // pred_fallthru
          _
        %s2206 = sand.u32 %s205, 1
        %s2207 = scalar_lea.sflag [#allocation4], %s2206
        %s2208 = sand.u32 %s205, 1
        %s2209 = smul.addr %s2208, 512
        %s2210 = scalar_lea.vmem [#allocation6], %s2209
        // Predicated region
        $region57: #{tpu_custom_call.1} parent=43 // pred_check
          %p2211 = pneg %p215
        $region58: #{tpu_custom_call.1} parent=43 // pred_check_branch
          %2213 = sbr.rel (%p2211) target = $region60
        $region59: #{tpu_custom_call.1} parent=43 // pred_region
          %s2214 = smul.u32 32, %s27
          %s2215 = smul.u32 2, %s28
          %2217 = vsyncadd %s2207, 0
          %s2218 = smul.addr %s2214, 4
          %s2219 = sadd.s32 %s2215, %s2218
          %s2220 = smul.addr %s2219, 8
          %s2221 = scalar_lea.hbm %s6, %s2220
          %s2222 = sshll.u32 %s2210, 4
          %s2223 = int_to_ptr.vmem [resolvable:$true] %s2222
          %s2224 = sshll.u32 %s2221, 4
          %s2225 = int_to_ptr.hbm [resolvable:$true] %s2224
          %2230 = dma.vmem_to_hbm [thread:$0]  %s2223, 8192, %s2225, %s2207, 256, 512, 16
        $region60: #{tpu_custom_call.1} parent=43 // pred_fallthru
          _
      $region44: #{tpu_custom_call.1} parent=5 // pred_fallthru
        _
      %p2231 = scmp.le.s32.totalorder 2, %s17
      // Predicated region
      $region61: #{tpu_custom_call.1} parent=5 // pred_check
        %p2232 = pneg %p2231
      $region62: #{tpu_custom_call.1} parent=5 // pred_check_branch
        %2234 = sbr.rel (%p2232) target = $region64
      $region63: #{tpu_custom_call.1} parent=5 // pred_region
        %s2235 = ssub.s32 %s17, 2
        // Predicated region
        $region65: #{tpu_custom_call.1} parent=63 // pred_check
          %p2236 = pneg %p221
        $region66: #{tpu_custom_call.1} parent=63 // pred_check_branch
          %2238 = sbr.rel (%p2236) target = $region68
        $region67: #{tpu_custom_call.1} parent=63 // pred_region
          %s2239 = sand.u32 %s206, 1
          %s2240 = scalar_lea.sflag [#allocation4], %s2239
          %s2241 = sand.u32 %s206, 1
          %s2242 = smul.addr %s2241, 512
          %s2243 = scalar_lea.vmem [#allocation6], %s2242
          %2245 = dma.done %s2240, 8192
        $region68: #{tpu_custom_call.1} parent=63 // pred_fallthru
          _
      $region64: #{tpu_custom_call.1} parent=5 // pred_fallthru
        _
    $region6: #{tpu_custom_call.1} parent=1 // loop_footer
      %s21 = sadd.s32 1, %s17
    $region7: #{tpu_custom_call.1} parent=1 // loop_footer_branch
      %16 = sbr.rel target = $region3
    $region8: #{tpu_custom_call.1} parent=1 // loop_exit
      _
    %2246 = vsyncpa [#allocation4], 1
    %s2247 = scalar_lea.sflag [#allocation4], 1
    %2248 = vsyncpa %s2247, 1
    %2249 = vsyncpa [#allocation5], 1
    %s2250 = scalar_lea.sflag [#allocation5], 1
    %2251 = vsyncpa %s2250, 1

</llo_original>
